<compile_context>
chip_gen: v7x
topology: tpu7x:2x2x1
jax: 0.10.0
libtpu: 0.0.40
codegen_flags: <defaults>
</compile_context>

<pallas_src>
import functools

import jax
import jax.numpy as jnp
from jax.experimental import pallas as pl
from jax.experimental.pallas import tpu as pltpu

ENC_DIMS = [28 * 28, 128, 64, 12, 3]
DEC_DIMS = [3, 12, 64, 128, 28 * 28]
_RELU_LAYERS = (0, 1, 2, 4, 5, 6)       # layers followed by ReLU; layer 7 -> sigmoid
_ALIGN = 16                             # sublane granule (safe for bf16 tiling)


def _autoencoder_kernel(x_ref,
                        w1, b1, w2, b2, w3, b3, w4, b4,     # encoder
                        w5, b5, w6, b6, w7, b7, w8, b8,     # decoder
                        out_ref, *, compute_dtype):
    """Fused MLP autoencoder forward on one batch tile."""
    ws = (w1, w2, w3, w4, w5, w6, w7, w8)
    bs = (b1, b2, b3, b4, b5, b6, b7, b8)

    h = x_ref[...].astype(compute_dtype)
    for i in range(8):
        # bf16 operands feed the MXU at full rate; accumulate in f32.
        acc = jnp.dot(h.astype(jnp.bfloat16), ws[i][...],
                      preferred_element_type=jnp.float32)
        h = acc.astype(compute_dtype) + bs[i][...]
        if i in _RELU_LAYERS:
            h = jnp.maximum(h, 0)
    # Final sigmoid: exp on the EUP, approx reciprocal also on the EUP.
    hf = h.astype(jnp.float32)
    sig = pl.reciprocal(1.0 + jnp.exp(-hf), approx=True)
    out_ref[...] = sig.astype(out_ref.dtype)


def _round_up(x, m):
    return ((x + m - 1) // m) * m


def _tpu_config():
    """Per-generation defaults: (tile_b, vmem_limit_bytes, compute_dtype)."""
    try:
        kind = jax.devices()[0].device_kind.lower()
    except Exception:  # pragma: no cover - defensive
        kind = ""
    is_v7 = "v7" in kind
    old_gen = any(t in kind for t in ("v2", "v3", "v4", "v5"))  # no bf16 VPU/EUP
    compute_dtype = jnp.float32 if old_gen else jnp.bfloat16
    tile_b = 512 if is_v7 else 1024
    vmem_limit = (48 if is_v7 else 64) * 1024 * 1024
    return tile_b, vmem_limit, compute_dtype


def init_params(key):
    """PyTorch-style init. Weights stored as (in, out) f32, biases (1, out) f32."""
    dims = list(zip(ENC_DIMS[:-1], ENC_DIMS[1:])) + list(zip(DEC_DIMS[:-1], DEC_DIMS[1:]))
    params = []
    for fan_in, fan_out in dims:
        key, wk, bk = jax.random.split(key, 3)
        bound = 1.0 / jnp.sqrt(fan_in)
        w = jax.random.uniform(wk, (fan_in, fan_out), jnp.float32, -bound, bound)
        b = jax.random.uniform(bk, (1, fan_out), jnp.float32, -bound, bound)
        params.append((w, b))
    return params


def prepare_params(params, compute_dtype=jnp.bfloat16):
    """One-time cast (outside the per-call path): bf16 weights, compute-dtype biases."""
    flat = []
    for w, b in params:
        flat.append(jnp.asarray(w, jnp.bfloat16))
        flat.append(jnp.asarray(b, compute_dtype))
    return flat


def autoencoder_forward(x, flat_params, *, tile_b=None, vmem_limit_bytes=None,
                        compute_dtype=None, out_dtype=jnp.bfloat16):
    """x: [B, 784] f32 -> [B, 784] reconstruction (out_dtype, default bf16)."""
    B, F = x.shape
    assert F == ENC_DIMS[0]

    d_tile, d_vmem, d_compute = _tpu_config()
    tile_b = tile_b or d_tile
    vmem_limit_bytes = vmem_limit_bytes or d_vmem
    compute_dtype = compute_dtype if compute_dtype is not None else d_compute

    # Pad the batch only up to the sublane granule (NOT a full tile); the last
    # grid block may be ragged and Pallas masks its reads/writes.
    Bp = _round_up(B, _ALIGN)
    if Bp != B:
        x = jnp.pad(x, ((0, Bp - B), (0, 0)))

    tb = min(tile_b, Bp)
    if Bp > _ALIGN:                      # keep grid >= 2 so v7x uses both TCs
        tb = min(tb, _round_up(pl.cdiv(Bp, 2), _ALIGN))
    tb = _round_up(tb, _ALIGN)
    grid = pl.cdiv(Bp, tb)

    # Constant index_map => parameters stay VMEM-resident across grid steps
    # (~0.4 MB in bf16, DMA'd once).
    param_specs = [pl.BlockSpec(p.shape, lambda i: (0, 0)) for p in flat_params]

    kernel = functools.partial(_autoencoder_kernel, compute_dtype=compute_dtype)
    out = pl.pallas_call(
        kernel,
        out_shape=jax.ShapeDtypeStruct((Bp, DEC_DIMS[-1]), out_dtype),
        grid=(grid,),
        in_specs=[pl.BlockSpec((tb, F), lambda i: (i, 0))] + param_specs,
        out_specs=pl.BlockSpec((tb, DEC_DIMS[-1]), lambda i: (i, 0)),
        compiler_params=pltpu.CompilerParams(
            dimension_semantics=("parallel",),    # v7x: shard batch tiles over both TCs
            vmem_limit_bytes=vmem_limit_bytes,
        ),
    )(x, *flat_params)

    if Bp != B:
        out = out[:B]
    return out


if __name__ == "__main__":
    key = jax.random.PRNGKey(0)
    key, xk = jax.random.split(key)

    B = 32                                   # small; still exercises a 2-step grid
    x = jax.random.uniform(xk, (B, 28 * 28), jnp.float32)

    params = init_params(key)
    _, _, compute_dtype = _tpu_config()
    flat_params = prepare_params(params, compute_dtype)     # one-time cast

    out = jax.block_until_ready(
        autoencoder_forward(x, flat_params, compute_dtype=compute_dtype))

    # Pure-JAX reference mirroring the kernel's bf16-MXU / compute-dtype path.
    h = x.astype(compute_dtype)
    for i, (w, b) in enumerate(params):
        acc = jnp.dot(h.astype(jnp.bfloat16), w.astype(jnp.bfloat16),
                      preferred_element_type=jnp.float32)
        h = acc.astype(compute_dtype) + b.astype(compute_dtype)
        if i in _RELU_LAYERS:
            h = jnp.maximum(h, 0)
    ref = jax.nn.sigmoid(h.astype(jnp.float32))

    assert out.shape == (B, 28 * 28)
    err = float(jnp.max(jnp.abs(out.astype(jnp.float32) - ref)))
    # bf16 output rounding (~4e-3 near 1.0) + approx reciprocal (~2e-4 rel).
    assert err < 2e-2, err
    print("KERNEL_OK")
</pallas_src>

<mosaic_0001>
module attributes {stable_mosaic.version = 11 : i64} {
  func.func @_autoencoder_kernel(%arg0: i32, %arg1: memref<16x784xf32, #tpu.memory_space<vmem>>, %arg2: memref<784x128xbf16, #tpu.memory_space<vmem>>, %arg3: memref<1x128xbf16, #tpu.memory_space<vmem>>, %arg4: memref<128x64xbf16, #tpu.memory_space<vmem>>, %arg5: memref<1x64xbf16, #tpu.memory_space<vmem>>, %arg6: memref<64x12xbf16, #tpu.memory_space<vmem>>, %arg7: memref<1x12xbf16, #tpu.memory_space<vmem>>, %arg8: memref<12x3xbf16, #tpu.memory_space<vmem>>, %arg9: memref<1x3xbf16, #tpu.memory_space<vmem>>, %arg10: memref<3x12xbf16, #tpu.memory_space<vmem>>, %arg11: memref<1x12xbf16, #tpu.memory_space<vmem>>, %arg12: memref<12x64xbf16, #tpu.memory_space<vmem>>, %arg13: memref<1x64xbf16, #tpu.memory_space<vmem>>, %arg14: memref<64x128xbf16, #tpu.memory_space<vmem>>, %arg15: memref<1x128xbf16, #tpu.memory_space<vmem>>, %arg16: memref<128x784xbf16, #tpu.memory_space<vmem>>, %arg17: memref<1x784xbf16, #tpu.memory_space<vmem>>, %arg18: memref<16x784xbf16, #tpu.memory_space<vmem>>) attributes {dimension_semantics = [#tpu.dimension_semantics<parallel>], iteration_bounds = array<i64: 2>, scalar_prefetch = 0 : i64, scratch_operands = 0 : i64, tpu.core_type = #tpu.core_type<tc>, window_params = [{transform_indices = @transform_0, window_bounds = array<i64: 16, 784>}, {pipeline_mode = #tpu.pipeline_mode<synchronous>, transform_indices = @transform_1, window_bounds = array<i64: 784, 128>}, {pipeline_mode = #tpu.pipeline_mode<synchronous>, transform_indices = @transform_2, window_bounds = array<i64: 1, 128>}, {pipeline_mode = #tpu.pipeline_mode<synchronous>, transform_indices = @transform_3, window_bounds = array<i64: 128, 64>}, {pipeline_mode = #tpu.pipeline_mode<synchronous>, transform_indices = @transform_4, window_bounds = array<i64: 1, 64>}, {pipeline_mode = #tpu.pipeline_mode<synchronous>, transform_indices = @transform_5, window_bounds = array<i64: 64, 12>}, {pipeline_mode = #tpu.pipeline_mode<synchronous>, transform_indices = @transform_6, window_bounds = array<i64: 1, 12>}, {pipeline_mode = #tpu.pipeline_mode<synchronous>, transform_indices = @transform_7, window_bounds = array<i64: 12, 3>}, {pipeline_mode = #tpu.pipeline_mode<synchronous>, transform_indices = @transform_8, window_bounds = array<i64: 1, 3>}, {pipeline_mode = #tpu.pipeline_mode<synchronous>, transform_indices = @transform_9, window_bounds = array<i64: 3, 12>}, {pipeline_mode = #tpu.pipeline_mode<synchronous>, transform_indices = @transform_10, window_bounds = array<i64: 1, 12>}, {pipeline_mode = #tpu.pipeline_mode<synchronous>, transform_indices = @transform_11, window_bounds = array<i64: 12, 64>}, {pipeline_mode = #tpu.pipeline_mode<synchronous>, transform_indices = @transform_12, window_bounds = array<i64: 1, 64>}, {pipeline_mode = #tpu.pipeline_mode<synchronous>, transform_indices = @transform_13, window_bounds = array<i64: 64, 128>}, {pipeline_mode = #tpu.pipeline_mode<synchronous>, transform_indices = @transform_14, window_bounds = array<i64: 1, 128>}, {pipeline_mode = #tpu.pipeline_mode<synchronous>, transform_indices = @transform_15, window_bounds = array<i64: 128, 784>}, {pipeline_mode = #tpu.pipeline_mode<synchronous>, transform_indices = @transform_16, window_bounds = array<i64: 1, 784>}, {transform_indices = @transform_17, window_bounds = array<i64: 16, 784>}]} {
    %c0 = arith.constant 0 : index
    %c0_0 = arith.constant 0 : index
    %0 = vector.load %arg1[%c0, %c0_0] : memref<16x784xf32, #tpu.memory_space<vmem>>, vector<16x784xf32>
    %1 = arith.truncf %0 : vector<16x784xf32> to vector<16x784xbf16>
    %c0_1 = arith.constant 0 : index
    %c0_2 = arith.constant 0 : index
    %2 = vector.load %arg2[%c0_1, %c0_2] : memref<784x128xbf16, #tpu.memory_space<vmem>>, vector<784x128xbf16>
    %cst = arith.constant dense<0.000000e+00> : vector<16x128xf32>
    %3 = tpu.matmul %1, %2, %cst {dimension_numbers = #tpu.dot_dimension_numbers<[1], [0], [0], [1], [0, 0, 1, 1], [], []>} : vector<16x784xbf16>, vector<784x128xbf16>, vector<16x128xf32> -> vector<16x128xf32>
    %4 = arith.truncf %3 : vector<16x128xf32> to vector<16x128xbf16>
    %c0_3 = arith.constant 0 : index
    %c0_4 = arith.constant 0 : index
    %5 = vector.load %arg3[%c0_3, %c0_4] : memref<1x128xbf16, #tpu.memory_space<vmem>>, vector<1x128xbf16>
    %6 = vector.broadcast %5 : vector<1x128xbf16> to vector<16x128xbf16>
    %7 = arith.addf %4, %6 : vector<16x128xbf16>
    %cst_5 = arith.constant 0.000000e+00 : bf16
    %8 = vector.broadcast %cst_5 : bf16 to vector<16x128xbf16>
    %9 = arith.maximumf %7, %8 : vector<16x128xbf16>
    %c0_6 = arith.constant 0 : index
    %c0_7 = arith.constant 0 : index
    %10 = vector.load %arg4[%c0_6, %c0_7] : memref<128x64xbf16, #tpu.memory_space<vmem>>, vector<128x64xbf16>
    %cst_8 = arith.constant dense<0.000000e+00> : vector<16x64xf32>
    %11 = tpu.matmul %9, %10, %cst_8 {dimension_numbers = #tpu.dot_dimension_numbers<[1], [0], [0], [1], [0, 0, 1, 1], [], []>} : vector<16x128xbf16>, vector<128x64xbf16>, vector<16x64xf32> -> vector<16x64xf32>
    %12 = arith.truncf %11 : vector<16x64xf32> to vector<16x64xbf16>
    %c0_9 = arith.constant 0 : index
    %c0_10 = arith.constant 0 : index
    %13 = vector.load %arg5[%c0_9, %c0_10] : memref<1x64xbf16, #tpu.memory_space<vmem>>, vector<1x64xbf16>
    %14 = vector.broadcast %13 : vector<1x64xbf16> to vector<16x64xbf16>
    %15 = arith.addf %12, %14 : vector<16x64xbf16>
    %cst_11 = arith.constant 0.000000e+00 : bf16
    %16 = vector.broadcast %cst_11 : bf16 to vector<16x64xbf16>
    %17 = arith.maximumf %15, %16 : vector<16x64xbf16>
    %c0_12 = arith.constant 0 : index
    %c0_13 = arith.constant 0 : index
    %18 = vector.load %arg6[%c0_12, %c0_13] : memref<64x12xbf16, #tpu.memory_space<vmem>>, vector<64x12xbf16>
    %cst_14 = arith.constant dense<0.000000e+00> : vector<16x12xf32>
    %19 = tpu.matmul %17, %18, %cst_14 {dimension_numbers = #tpu.dot_dimension_numbers<[1], [0], [0], [1], [0, 0, 1, 1], [], []>} : vector<16x64xbf16>, vector<64x12xbf16>, vector<16x12xf32> -> vector<16x12xf32>
    %20 = arith.truncf %19 : vector<16x12xf32> to vector<16x12xbf16>
    %c0_15 = arith.constant 0 : index
    %c0_16 = arith.constant 0 : index
    %21 = vector.load %arg7[%c0_15, %c0_16] : memref<1x12xbf16, #tpu.memory_space<vmem>>, vector<1x12xbf16>
    %22 = vector.broadcast %21 : vector<1x12xbf16> to vector<16x12xbf16>
    %23 = arith.addf %20, %22 : vector<16x12xbf16>
    %cst_17 = arith.constant 0.000000e+00 : bf16
    %24 = vector.broadcast %cst_17 : bf16 to vector<16x12xbf16>
    %25 = arith.maximumf %23, %24 : vector<16x12xbf16>
    %c0_18 = arith.constant 0 : index
    %c0_19 = arith.constant 0 : index
    %26 = vector.load %arg8[%c0_18, %c0_19] : memref<12x3xbf16, #tpu.memory_space<vmem>>, vector<12x3xbf16>
    %cst_20 = arith.constant dense<0.000000e+00> : vector<16x3xf32>
    %27 = tpu.matmul %25, %26, %cst_20 {dimension_numbers = #tpu.dot_dimension_numbers<[1], [0], [0], [1], [0, 0, 1, 1], [], []>} : vector<16x12xbf16>, vector<12x3xbf16>, vector<16x3xf32> -> vector<16x3xf32>
    %28 = arith.truncf %27 : vector<16x3xf32> to vector<16x3xbf16>
    %c0_21 = arith.constant 0 : index
    %c0_22 = arith.constant 0 : index
    %29 = vector.load %arg9[%c0_21, %c0_22] : memref<1x3xbf16, #tpu.memory_space<vmem>>, vector<1x3xbf16>
    %30 = vector.broadcast %29 : vector<1x3xbf16> to vector<16x3xbf16>
    %31 = arith.addf %28, %30 : vector<16x3xbf16>
    %c0_23 = arith.constant 0 : index
    %c0_24 = arith.constant 0 : index
    %32 = vector.load %arg10[%c0_23, %c0_24] : memref<3x12xbf16, #tpu.memory_space<vmem>>, vector<3x12xbf16>
    %cst_25 = arith.constant dense<0.000000e+00> : vector<16x12xf32>
    %33 = tpu.matmul %31, %32, %cst_25 {dimension_numbers = #tpu.dot_dimension_numbers<[1], [0], [0], [1], [0, 0, 1, 1], [], []>} : vector<16x3xbf16>, vector<3x12xbf16>, vector<16x12xf32> -> vector<16x12xf32>
    %34 = arith.truncf %33 : vector<16x12xf32> to vector<16x12xbf16>
    %c0_26 = arith.constant 0 : index
    %c0_27 = arith.constant 0 : index
    %35 = vector.load %arg11[%c0_26, %c0_27] : memref<1x12xbf16, #tpu.memory_space<vmem>>, vector<1x12xbf16>
    %36 = vector.broadcast %35 : vector<1x12xbf16> to vector<16x12xbf16>
    %37 = arith.addf %34, %36 : vector<16x12xbf16>
    %cst_28 = arith.constant 0.000000e+00 : bf16
    %38 = vector.broadcast %cst_28 : bf16 to vector<16x12xbf16>
    %39 = arith.maximumf %37, %38 : vector<16x12xbf16>
    %c0_29 = arith.constant 0 : index
    %c0_30 = arith.constant 0 : index
    %40 = vector.load %arg12[%c0_29, %c0_30] : memref<12x64xbf16, #tpu.memory_space<vmem>>, vector<12x64xbf16>
    %cst_31 = arith.constant dense<0.000000e+00> : vector<16x64xf32>
    %41 = tpu.matmul %39, %40, %cst_31 {dimension_numbers = #tpu.dot_dimension_numbers<[1], [0], [0], [1], [0, 0, 1, 1], [], []>} : vector<16x12xbf16>, vector<12x64xbf16>, vector<16x64xf32> -> vector<16x64xf32>
    %42 = arith.truncf %41 : vector<16x64xf32> to vector<16x64xbf16>
    %c0_32 = arith.constant 0 : index
    %c0_33 = arith.constant 0 : index
    %43 = vector.load %arg13[%c0_32, %c0_33] : memref<1x64xbf16, #tpu.memory_space<vmem>>, vector<1x64xbf16>
    %44 = vector.broadcast %43 : vector<1x64xbf16> to vector<16x64xbf16>
    %45 = arith.addf %42, %44 : vector<16x64xbf16>
    %cst_34 = arith.constant 0.000000e+00 : bf16
    %46 = vector.broadcast %cst_34 : bf16 to vector<16x64xbf16>
    %47 = arith.maximumf %45, %46 : vector<16x64xbf16>
    %c0_35 = arith.constant 0 : index
    %c0_36 = arith.constant 0 : index
    %48 = vector.load %arg14[%c0_35, %c0_36] : memref<64x128xbf16, #tpu.memory_space<vmem>>, vector<64x128xbf16>
    %cst_37 = arith.constant dense<0.000000e+00> : vector<16x128xf32>
    %49 = tpu.matmul %47, %48, %cst_37 {dimension_numbers = #tpu.dot_dimension_numbers<[1], [0], [0], [1], [0, 0, 1, 1], [], []>} : vector<16x64xbf16>, vector<64x128xbf16>, vector<16x128xf32> -> vector<16x128xf32>
    %50 = arith.truncf %49 : vector<16x128xf32> to vector<16x128xbf16>
    %c0_38 = arith.constant 0 : index
    %c0_39 = arith.constant 0 : index
    %51 = vector.load %arg15[%c0_38, %c0_39] : memref<1x128xbf16, #tpu.memory_space<vmem>>, vector<1x128xbf16>
    %52 = vector.broadcast %51 : vector<1x128xbf16> to vector<16x128xbf16>
    %53 = arith.addf %50, %52 : vector<16x128xbf16>
    %cst_40 = arith.constant 0.000000e+00 : bf16
    %54 = vector.broadcast %cst_40 : bf16 to vector<16x128xbf16>
    %55 = arith.maximumf %53, %54 : vector<16x128xbf16>
    %c0_41 = arith.constant 0 : index
    %c0_42 = arith.constant 0 : index
    %56 = vector.load %arg16[%c0_41, %c0_42] : memref<128x784xbf16, #tpu.memory_space<vmem>>, vector<128x784xbf16>
    %cst_43 = arith.constant dense<0.000000e+00> : vector<16x784xf32>
    %57 = tpu.matmul %55, %56, %cst_43 {dimension_numbers = #tpu.dot_dimension_numbers<[1], [0], [0], [1], [0, 0, 1, 1], [], []>} : vector<16x128xbf16>, vector<128x784xbf16>, vector<16x784xf32> -> vector<16x784xf32>
    %58 = arith.truncf %57 : vector<16x784xf32> to vector<16x784xbf16>
    %c0_44 = arith.constant 0 : index
    %c0_45 = arith.constant 0 : index
    %59 = vector.load %arg17[%c0_44, %c0_45] : memref<1x784xbf16, #tpu.memory_space<vmem>>, vector<1x784xbf16>
    %60 = vector.broadcast %59 : vector<1x784xbf16> to vector<16x784xbf16>
    %61 = arith.addf %58, %60 : vector<16x784xbf16>
    %62 = arith.extf %61 : vector<16x784xbf16> to vector<16x784xf32>
    %cst_46 = arith.constant 0.000000e+00 : f32
    %63 = vector.broadcast %cst_46 : f32 to vector<16x784xf32>
    %64 = arith.subf %63, %62 : vector<16x784xf32>
    %65 = math.exp %64 : vector<16x784xf32>
    %cst_47 = arith.constant 1.000000e+00 : f32
    %66 = vector.broadcast %cst_47 : f32 to vector<16x784xf32>
    %67 = arith.addf %66, %65 : vector<16x784xf32>
    %68 = tpu.reciprocal %67 {approx = true} : vector<16x784xf32> -> vector<16x784xf32>
    %69 = arith.truncf %68 : vector<16x784xf32> to vector<16x784xbf16>
    %c0_48 = arith.constant 0 : index
    %c0_49 = arith.constant 0 : index
    %70 = vector.load %arg18[%c0_48, %c0_49] : memref<16x784xbf16, #tpu.memory_space<vmem>>, vector<16x784xbf16>
    tpu.vector_store %arg18[%c0_48, %c0_49], %69 {strides = array<i32>} : memref<16x784xbf16, #tpu.memory_space<vmem>>, vector<16x784xbf16>,
    return
  }
  func.func @transform_0(%arg0: i32) -> (i32, i32) {
    %c0_i32 = arith.constant 0 : i32
    %c0_i32_0 = arith.constant 0 : i32
    return %arg0, %c0_i32 : i32, i32
  }
  func.func @transform_1(%arg0: i32) -> (i32, i32) {
    %c0_i32 = arith.constant 0 : i32
    %c0_i32_0 = arith.constant 0 : i32
    %c0_i32_1 = arith.constant 0 : i32
    return %c0_i32, %c0_i32_0 : i32, i32
  }
  func.func @transform_2(%arg0: i32) -> (i32, i32) {
    %c0_i32 = arith.constant 0 : i32
    %c0_i32_0 = arith.constant 0 : i32
    %c0_i32_1 = arith.constant 0 : i32
    return %c0_i32, %c0_i32_0 : i32, i32
  }
  func.func @transform_3(%arg0: i32) -> (i32, i32) {
    %c0_i32 = arith.constant 0 : i32
    %c0_i32_0 = arith.constant 0 : i32
    %c0_i32_1 = arith.constant 0 : i32
    return %c0_i32, %c0_i32_0 : i32, i32
  }
  func.func @transform_4(%arg0: i32) -> (i32, i32) {
    %c0_i32 = arith.constant 0 : i32
    %c0_i32_0 = arith.constant 0 : i32
    %c0_i32_1 = arith.constant 0 : i32
    return %c0_i32, %c0_i32_0 : i32, i32
  }
  func.func @transform_5(%arg0: i32) -> (i32, i32) {
    %c0_i32 = arith.constant 0 : i32
    %c0_i32_0 = arith.constant 0 : i32
    %c0_i32_1 = arith.constant 0 : i32
    return %c0_i32, %c0_i32_0 : i32, i32
  }
  func.func @transform_6(%arg0: i32) -> (i32, i32) {
    %c0_i32 = arith.constant 0 : i32
    %c0_i32_0 = arith.constant 0 : i32
    %c0_i32_1 = arith.constant 0 : i32
    return %c0_i32, %c0_i32_0 : i32, i32
  }
  func.func @transform_7(%arg0: i32) -> (i32, i32) {
    %c0_i32 = arith.constant 0 : i32
    %c0_i32_0 = arith.constant 0 : i32
    %c0_i32_1 = arith.constant 0 : i32
    return %c0_i32, %c0_i32_0 : i32, i32
  }
  func.func @transform_8(%arg0: i32) -> (i32, i32) {
    %c0_i32 = arith.constant 0 : i32
    %c0_i32_0 = arith.constant 0 : i32
    %c0_i32_1 = arith.constant 0 : i32
    return %c0_i32, %c0_i32_0 : i32, i32
  }
  func.func @transform_9(%arg0: i32) -> (i32, i32) {
    %c0_i32 = arith.constant 0 : i32
    %c0_i32_0 = arith.constant 0 : i32
    %c0_i32_1 = arith.constant 0 : i32
    return %c0_i32, %c0_i32_0 : i32, i32
  }
  func.func @transform_10(%arg0: i32) -> (i32, i32) {
    %c0_i32 = arith.constant 0 : i32
    %c0_i32_0 = arith.constant 0 : i32
    %c0_i32_1 = arith.constant 0 : i32
    return %c0_i32, %c0_i32_0 : i32, i32
  }
  func.func @transform_11(%arg0: i32) -> (i32, i32) {
    %c0_i32 = arith.constant 0 : i32
    %c0_i32_0 = arith.constant 0 : i32
    %c0_i32_1 = arith.constant 0 : i32
    return %c0_i32, %c0_i32_0 : i32, i32
  }
  func.func @transform_12(%arg0: i32) -> (i32, i32) {
    %c0_i32 = arith.constant 0 : i32
    %c0_i32_0 = arith.constant 0 : i32
    %c0_i32_1 = arith.constant 0 : i32
    return %c0_i32, %c0_i32_0 : i32, i32
  }
  func.func @transform_13(%arg0: i32) -> (i32, i32) {
    %c0_i32 = arith.constant 0 : i32
    %c0_i32_0 = arith.constant 0 : i32
    %c0_i32_1 = arith.constant 0 : i32
    return %c0_i32, %c0_i32_0 : i32, i32
  }
  func.func @transform_14(%arg0: i32) -> (i32, i32) {
    %c0_i32 = arith.constant 0 : i32
    %c0_i32_0 = arith.constant 0 : i32
    %c0_i32_1 = arith.constant 0 : i32
    return %c0_i32, %c0_i32_0 : i32, i32
  }
  func.func @transform_15(%arg0: i32) -> (i32, i32) {
    %c0_i32 = arith.constant 0 : i32
    %c0_i32_0 = arith.constant 0 : i32
    %c0_i32_1 = arith.constant 0 : i32
    return %c0_i32, %c0_i32_0 : i32, i32
  }
  func.func @transform_16(%arg0: i32) -> (i32, i32) {
    %c0_i32 = arith.constant 0 : i32
    %c0_i32_0 = arith.constant 0 : i32
    %c0_i32_1 = arith.constant 0 : i32
    return %c0_i32, %c0_i32_0 : i32, i32
  }
  func.func @transform_17(%arg0: i32) -> (i32, i32) {
    %c0_i32 = arith.constant 0 : i32
    %c0_i32_0 = arith.constant 0 : i32
    return %arg0, %c0_i32 : i32, i32
  }
}

</mosaic_0001>

<llo_original>
// kernel: tpu_custom_call.1
$region0: #{tpu_custom_call.1}
  #allocation0 [shape = 'u32[]', space=smem, size = 0x4, offset = 0x4, fixed_abs, tag = 'smem constant byte address 0x4 - core index']
  #allocation1 [shape = 'u32[144,128]{1,0:T(1,128)}', space=vmem, size = 0x12000, scoped, tag = 'internal scratch']
  %s0 = inlined_call_operand.hbm [shape: f32[32,784], index: 0, kind: input, shape index: {}]
  %s1 = inlined_call_operand.hbm [shape: bf16[784,128], index: 1, kind: input, shape index: {}]
  %s2 = inlined_call_operand.hbm [shape: bf16[1,128], index: 2, kind: input, shape index: {}]
  %s3 = inlined_call_operand.hbm [shape: bf16[128,64], index: 3, kind: input, shape index: {}]
  %s4 = inlined_call_operand.hbm [shape: bf16[1,64], index: 4, kind: input, shape index: {}]
  %s5 = inlined_call_operand.hbm [shape: bf16[64,12], index: 5, kind: input, shape index: {}]
  %s6 = inlined_call_operand.hbm [shape: bf16[1,12], index: 6, kind: input, shape index: {}]
  %s7 = inlined_call_operand.hbm [shape: bf16[12,3], index: 7, kind: input, shape index: {}]
  %s8 = inlined_call_operand.hbm [shape: bf16[1,3], index: 8, kind: input, shape index: {}]
  %s9 = inlined_call_operand.hbm [shape: bf16[3,12], index: 9, kind: input, shape index: {}]
  %s10 = inlined_call_operand.hbm [shape: bf16[1,12], index: 10, kind: input, shape index: {}]
  %s11 = inlined_call_operand.hbm [shape: bf16[12,64], index: 11, kind: input, shape index: {}]
  %s12 = inlined_call_operand.hbm [shape: bf16[1,64], index: 12, kind: input, shape index: {}]
  %s13 = inlined_call_operand.hbm [shape: bf16[64,128], index: 13, kind: input, shape index: {}]
  %s14 = inlined_call_operand.hbm [shape: bf16[1,128], index: 14, kind: input, shape index: {}]
  %s15 = inlined_call_operand.hbm [shape: bf16[128,784], index: 15, kind: input, shape index: {}]
  %s16 = inlined_call_operand.hbm [shape: bf16[1,784], index: 16, kind: input, shape index: {}]
  %s17 = inlined_call_operand.hbm [shape: bf16[32,784], index: 17, kind: output, shape index: {}]
  %s18 = sld [smem:[#allocation0]]
  $region169: #{tpu_custom_call.1} parent=0
    _
  %s20 = ssub.s32 1, %s18
  %s21 = scalar_select 0, %s20, %s18
  $region1: #{tpu_custom_call.1} parent=0
    #allocation2 [shape = 'u8[114688]{0}', space=vmem, size = 0x1c000, scoped, tag = 'input window, operand 0']
    #allocation3 [shape = 's32[2]{0}', space=sflag, size = 0x8, scoped, tag = 'scoped memory for tpu_custom_call.1']
    #allocation4 [shape = 's32[2]{0}', space=sflag, size = 0x8, scoped, tag = 'scoped memory for tpu_custom_call.1']
    #allocation5 [shape = 'u8[200704]{0}', space=vmem, size = 0x31000, scoped, tag = 'input window, operand 1, single buffered']
    #allocation6 [shape = 's32[1]{0}', space=sflag, size = 0x4, scoped, tag = 'scoped memory for tpu_custom_call.1']
    #allocation7 [shape = 'u8[512]{0}', space=vmem, size = 0x400, scoped, tag = 'input window, operand 2, single buffered']
    #allocation8 [shape = 'u8[32768]{0}', space=vmem, size = 0x8000, scoped, tag = 'input window, operand 3, single buffered']
    #allocation9 [shape = 's32[1]{0}', space=sflag, size = 0x4, scoped, tag = 'scoped memory for tpu_custom_call.1']
    #allocation10 [shape = 'u8[512]{0}', space=vmem, size = 0x400, scoped, tag = 'input window, operand 4, single buffered']
    #allocation11 [shape = 'u8[16384]{0}', space=vmem, size = 0x4000, scoped, tag = 'input window, operand 5, single buffered']
    #allocation12 [shape = 's32[1]{0}', space=sflag, size = 0x4, scoped, tag = 'scoped memory for tpu_custom_call.1']
    #allocation13 [shape = 'u8[512]{0}', space=vmem, size = 0x400, scoped, tag = 'input window, operand 6, single buffered']
    #allocation14 [shape = 'u8[4096]{0}', space=vmem, size = 0x1000, scoped, tag = 'input window, operand 7, single buffered']
    #allocation15 [shape = 's32[1]{0}', space=sflag, size = 0x4, scoped, tag = 'scoped memory for tpu_custom_call.1']
    #allocation16 [shape = 'u8[512]{0}', space=vmem, size = 0x400, scoped, tag = 'input window, operand 8, single buffered']
    #allocation17 [shape = 'u8[1024]{0}', space=vmem, size = 0x400, scoped, tag = 'input window, operand 9, single buffered']
    #allocation18 [shape = 's32[1]{0}', space=sflag, size = 0x4, scoped, tag = 'scoped memory for tpu_custom_call.1']
    #allocation19 [shape = 'u8[512]{0}', space=vmem, size = 0x400, scoped, tag = 'input window, operand 10, single buffered']
    #allocation20 [shape = 'u8[4096]{0}', space=vmem, size = 0x1000, scoped, tag = 'input window, operand 11, single buffered']
    #allocation21 [shape = 's32[1]{0}', space=sflag, size = 0x4, scoped, tag = 'scoped memory for tpu_custom_call.1']
    #allocation22 [shape = 'u8[512]{0}', space=vmem, size = 0x400, scoped, tag = 'input window, operand 12, single buffered']
    #allocation23 [shape = 'u8[16384]{0}', space=vmem, size = 0x4000, scoped, tag = 'input window, operand 13, single buffered']
    #allocation24 [shape = 's32[1]{0}', space=sflag, size = 0x4, scoped, tag = 'scoped memory for tpu_custom_call.1']
    #allocation25 [shape = 'u8[512]{0}', space=vmem, size = 0x400, scoped, tag = 'input window, operand 14, single buffered']
    #allocation26 [shape = 'u8[229376]{0}', space=vmem, size = 0x38000, scoped, tag = 'input window, operand 15, single buffered']
    #allocation27 [shape = 's32[1]{0}', space=sflag, size = 0x4, scoped, tag = 'scoped memory for tpu_custom_call.1']
    #allocation28 [shape = 'u8[3584]{0}', space=vmem, size = 0x1000, scoped, tag = 'input window, operand 16, single buffered']
    #allocation29 [shape = 'u8[57344]{0}', space=vmem, size = 0xe000, scoped, tag = 'output window, operand 0']
    %22 = vsyncpa [#allocation3], 0
    %s23 = scalar_lea.sflag [#allocation3], 1
    %24 = vsyncpa %s23, 0
    %25 = vsyncpa [#allocation6], 0
    %26 = vsyncpa [#allocation9], 0
    %27 = vsyncpa [#allocation12], 0
    %28 = vsyncpa [#allocation15], 0
    %29 = vsyncpa [#allocation18], 0
    %30 = vsyncpa [#allocation21], 0
    %31 = vsyncpa [#allocation24], 0
    %32 = vsyncpa [#allocation27], 0
    %33 = vsyncpa [#allocation4], 0
    %s34 = scalar_lea.sflag [#allocation4], 1
    %35 = vsyncpa %s34, 0
    loop: start=0, step=1, limit=4
    $region2: #{tpu_custom_call.1} parent=1 // loop_pre_header
      _
    $region3: #{tpu_custom_call.1} parent=1 // loop_header
      %s37 = sphi 0, %s41
      %p38 = scmp.ge.s32.totalorder %s37, 4
      %s47 = sphi 0, %s49
      %s50 = sphi 0, %s47
      %s51 = sphi 0, %s50
      %s67 = sphi 0, %s51
      %s71 = sphi 0, %s71
      %s73 = sphi 0, %s71
      %s74 = sphi 0, %s73
      %s88 = sphi 0, %s74
      %s92 = sphi 0, %s92
      %s94 = sphi 0, %s92
      %s95 = sphi 0, %s94
      %s109 = sphi 0, %s95
      %s113 = sphi 0, %s113
      %s115 = sphi 0, %s113
      %s116 = sphi 0, %s115
      %s130 = sphi 0, %s116
      %s134 = sphi 0, %s134
      %s136 = sphi 0, %s134
      %s137 = sphi 0, %s136
      %s151 = sphi 0, %s137
      %s155 = sphi 0, %s155
      %s157 = sphi 0, %s155
      %s158 = sphi 0, %s157
      %s172 = sphi 0, %s158
      %s176 = sphi 0, %s176
      %s178 = sphi 0, %s176
      %s179 = sphi 0, %s178
      %s193 = sphi 0, %s179
      %s197 = sphi 0, %s197
      %s199 = sphi 0, %s197
      %s200 = sphi 0, %s199
      %s214 = sphi 0, %s200
      %s218 = sphi 0, %s218
      %s220 = sphi 0, %s218
      %s221 = sphi 0, %s220
      %s235 = sphi 0, %s221
      %s239 = sphi 0, %s239
      %s241 = sphi 0, %s239
      %s242 = sphi 0, %s241
      %s256 = sphi 0, %s242
      %s260 = sphi 0, %s260
      %s262 = sphi 0, %s260
      %s263 = sphi 0, %s262
      %s277 = sphi 0, %s263
      %s281 = sphi 0, %s281
      %s283 = sphi 0, %s281
      %s284 = sphi 0, %s283
      %s298 = sphi 0, %s284
      %s302 = sphi 0, %s302
      %s304 = sphi 0, %s302
      %s305 = sphi 0, %s304
      %s319 = sphi 0, %s305
      %s323 = sphi 0, %s323
      %s325 = sphi 0, %s323
      %s326 = sphi 0, %s325
      %s340 = sphi 0, %s326
      %s344 = sphi 0, %s344
      %s346 = sphi 0, %s344
      %s347 = sphi 0, %s346
      %s361 = sphi 0, %s347
      %s365 = sphi 0, %s365
      %s367 = sphi 0, %s365
      %s368 = sphi 0, %s367
      %s382 = sphi 0, %s368
      %s386 = sphi 0, %s386
      %s388 = sphi 0, %s386
      %s389 = sphi 0, %s388
      %s403 = sphi 0, %s389
      %s409 = sphi 0, %s411
      %s412 = sphi 0, %s409
      %s413 = sphi 0, %s412
      %s429 = sphi 0, %s413
    $region4: #{tpu_custom_call.1} parent=1 // loop_header_branch
      %40 = sbr.rel (%p38) target = $region8
    $region5: #{tpu_custom_call.1} parent=1 // loop_body
      %s42 = ssub.s32 %s37, 1
      %s43 = ssub.s32 %s37, 2
      %s44 = sadd.s32 %s37, 1
      %s45 = ssub.s32 %s37, %s44
      %p46 = scmp.eq.s32.totalorder %s45, 0
      %s48 = sadd.s32 %s47, 1
      %s49 = scalar_select %p46, %s47, %s48
      %p52 = pneg %p46
      %p53 = scmp.eq.s32.totalorder %s37, 1
      %p54 = por %p52, %p53
      %p55 = scmp.ne.s32.totalorder %s47, %s50
      %p56 = scmp.eq.s32.totalorder %s37, 0
      %p57 = por %p55, %p56
      %p58 = scmp.ne.s32.totalorder %s47, %s50
      %p59 = scmp.eq.s32.totalorder %s42, 1
      %p60 = por %p58, %p59
      %p61 = scmp.ne.s32.totalorder %s50, %s51
      %p62 = scmp.eq.s32.totalorder %s42, 0
      %p63 = por %p61, %p62
      %p64 = scmp.ne.s32.totalorder %s50, %s51
      %p65 = scmp.eq.s32.totalorder %s43, 1
      %p66 = por %p64, %p65
      %p68 = scmp.ne.s32.totalorder %s51, %s67
      %p69 = scmp.eq.s32.totalorder %s43, 0
      %p70 = por %p68, %p69
      %s72 = sadd.s32 %s71, 1
      %p75 = scmp.eq.s32.totalorder %s37, 1
      %p76 = scmp.ne.s32.totalorder %s71, %s73
      %p77 = scmp.eq.s32.totalorder %s37, 0
      %p78 = por %p76, %p77
      %p79 = scmp.ne.s32.totalorder %s71, %s73
      %p80 = scmp.eq.s32.totalorder %s42, 1
      %p81 = por %p79, %p80
      %p82 = scmp.ne.s32.totalorder %s73, %s74
      %p83 = scmp.eq.s32.totalorder %s42, 0
      %p84 = por %p82, %p83
      %p85 = scmp.ne.s32.totalorder %s73, %s74
      %p86 = scmp.eq.s32.totalorder %s43, 1
      %p87 = por %p85, %p86
      %p89 = scmp.ne.s32.totalorder %s74, %s88
      %p90 = scmp.eq.s32.totalorder %s43, 0
      %p91 = por %p89, %p90
      %s93 = sadd.s32 %s92, 1
      %p96 = scmp.eq.s32.totalorder %s37, 1
      %p97 = scmp.ne.s32.totalorder %s92, %s94
      %p98 = scmp.eq.s32.totalorder %s37, 0
      %p99 = por %p97, %p98
      %p100 = scmp.ne.s32.totalorder %s92, %s94
      %p101 = scmp.eq.s32.totalorder %s42, 1
      %p102 = por %p100, %p101
      %p103 = scmp.ne.s32.totalorder %s94, %s95
      %p104 = scmp.eq.s32.totalorder %s42, 0
      %p105 = por %p103, %p104
      %p106 = scmp.ne.s32.totalorder %s94, %s95
      %p107 = scmp.eq.s32.totalorder %s43, 1
      %p108 = por %p106, %p107
      %p110 = scmp.ne.s32.totalorder %s95, %s109
      %p111 = scmp.eq.s32.totalorder %s43, 0
      %p112 = por %p110, %p111
      %s114 = sadd.s32 %s113, 1
      %p117 = scmp.eq.s32.totalorder %s37, 1
      %p118 = scmp.ne.s32.totalorder %s113, %s115
      %p119 = scmp.eq.s32.totalorder %s37, 0
      %p120 = por %p118, %p119
      %p121 = scmp.ne.s32.totalorder %s113, %s115
      %p122 = scmp.eq.s32.totalorder %s42, 1
      %p123 = por %p121, %p122
      %p124 = scmp.ne.s32.totalorder %s115, %s116
      %p125 = scmp.eq.s32.totalorder %s42, 0
      %p126 = por %p124, %p125
      %p127 = scmp.ne.s32.totalorder %s115, %s116
      %p128 = scmp.eq.s32.totalorder %s43, 1
      %p129 = por %p127, %p128
      %p131 = scmp.ne.s32.totalorder %s116, %s130
      %p132 = scmp.eq.s32.totalorder %s43, 0
      %p133 = por %p131, %p132
      %s135 = sadd.s32 %s134, 1
      %p138 = scmp.eq.s32.totalorder %s37, 1
      %p139 = scmp.ne.s32.totalorder %s134, %s136
      %p140 = scmp.eq.s32.totalorder %s37, 0
      %p141 = por %p139, %p140
      %p142 = scmp.ne.s32.totalorder %s134, %s136
      %p143 = scmp.eq.s32.totalorder %s42, 1
      %p144 = por %p142, %p143
      %p145 = scmp.ne.s32.totalorder %s136, %s137
      %p146 = scmp.eq.s32.totalorder %s42, 0
      %p147 = por %p145, %p146
      %p148 = scmp.ne.s32.totalorder %s136, %s137
      %p149 = scmp.eq.s32.totalorder %s43, 1
      %p150 = por %p148, %p149
      %p152 = scmp.ne.s32.totalorder %s137, %s151
      %p153 = scmp.eq.s32.totalorder %s43, 0
      %p154 = por %p152, %p153
      %s156 = sadd.s32 %s155, 1
      %p159 = scmp.eq.s32.totalorder %s37, 1
      %p160 = scmp.ne.s32.totalorder %s155, %s157
      %p161 = scmp.eq.s32.totalorder %s37, 0
      %p162 = por %p160, %p161
      %p163 = scmp.ne.s32.totalorder %s155, %s157
      %p164 = scmp.eq.s32.totalorder %s42, 1
      %p165 = por %p163, %p164
      %p166 = scmp.ne.s32.totalorder %s157, %s158
      %p167 = scmp.eq.s32.totalorder %s42, 0
      %p168 = por %p166, %p167
      %p169 = scmp.ne.s32.totalorder %s157, %s158
      %p170 = scmp.eq.s32.totalorder %s43, 1
      %p171 = por %p169, %p170
      %p173 = scmp.ne.s32.totalorder %s158, %s172
      %p174 = scmp.eq.s32.totalorder %s43, 0
      %p175 = por %p173, %p174
      %s177 = sadd.s32 %s176, 1
      %p180 = scmp.eq.s32.totalorder %s37, 1
      %p181 = scmp.ne.s32.totalorder %s176, %s178
      %p182 = scmp.eq.s32.totalorder %s37, 0
      %p183 = por %p181, %p182
      %p184 = scmp.ne.s32.totalorder %s176, %s178
      %p185 = scmp.eq.s32.totalorder %s42, 1
      %p186 = por %p184, %p185
      %p187 = scmp.ne.s32.totalorder %s178, %s179
      %p188 = scmp.eq.s32.totalorder %s42, 0
      %p189 = por %p187, %p188
      %p190 = scmp.ne.s32.totalorder %s178, %s179
      %p191 = scmp.eq.s32.totalorder %s43, 1
      %p192 = por %p190, %p191
      %p194 = scmp.ne.s32.totalorder %s179, %s193
      %p195 = scmp.eq.s32.totalorder %s43, 0
      %p196 = por %p194, %p195
      %s198 = sadd.s32 %s197, 1
      %p201 = scmp.eq.s32.totalorder %s37, 1
      %p202 = scmp.ne.s32.totalorder %s197, %s199
      %p203 = scmp.eq.s32.totalorder %s37, 0
      %p204 = por %p202, %p203
      %p205 = scmp.ne.s32.totalorder %s197, %s199
      %p206 = scmp.eq.s32.totalorder %s42, 1
      %p207 = por %p205, %p206
      %p208 = scmp.ne.s32.totalorder %s199, %s200
      %p209 = scmp.eq.s32.totalorder %s42, 0
      %p210 = por %p208, %p209
      %p211 = scmp.ne.s32.totalorder %s199, %s200
      %p212 = scmp.eq.s32.totalorder %s43, 1
      %p213 = por %p211, %p212
      %p215 = scmp.ne.s32.totalorder %s200, %s214
      %p216 = scmp.eq.s32.totalorder %s43, 0
      %p217 = por %p215, %p216
      %s219 = sadd.s32 %s218, 1
      %p222 = scmp.eq.s32.totalorder %s37, 1
      %p223 = scmp.ne.s32.totalorder %s218, %s220
      %p224 = scmp.eq.s32.totalorder %s37, 0
      %p225 = por %p223, %p224
      %p226 = scmp.ne.s32.totalorder %s218, %s220
      %p227 = scmp.eq.s32.totalorder %s42, 1
      %p228 = por %p226, %p227
      %p229 = scmp.ne.s32.totalorder %s220, %s221
      %p230 = scmp.eq.s32.totalorder %s42, 0
      %p231 = por %p229, %p230
      %p232 = scmp.ne.s32.totalorder %s220, %s221
      %p233 = scmp.eq.s32.totalorder %s43, 1
      %p234 = por %p232, %p233
      %p236 = scmp.ne.s32.totalorder %s221, %s235
      %p237 = scmp.eq.s32.totalorder %s43, 0
      %p238 = por %p236, %p237
      %s240 = sadd.s32 %s239, 1
      %p243 = scmp.eq.s32.totalorder %s37, 1
      %p244 = scmp.ne.s32.totalorder %s239, %s241
      %p245 = scmp.eq.s32.totalorder %s37, 0
      %p246 = por %p244, %p245
      %p247 = scmp.ne.s32.totalorder %s239, %s241
      %p248 = scmp.eq.s32.totalorder %s42, 1
      %p249 = por %p247, %p248
      %p250 = scmp.ne.s32.totalorder %s241, %s242
      %p251 = scmp.eq.s32.totalorder %s42, 0
      %p252 = por %p250, %p251
      %p253 = scmp.ne.s32.totalorder %s241, %s242
      %p254 = scmp.eq.s32.totalorder %s43, 1
      %p255 = por %p253, %p254
      %p257 = scmp.ne.s32.totalorder %s242, %s256
      %p258 = scmp.eq.s32.totalorder %s43, 0
      %p259 = por %p257, %p258
      %s261 = sadd.s32 %s260, 1
      %p264 = scmp.eq.s32.totalorder %s37, 1
      %p265 = scmp.ne.s32.totalorder %s260, %s262
      %p266 = scmp.eq.s32.totalorder %s37, 0
      %p267 = por %p265, %p266
      %p268 = scmp.ne.s32.totalorder %s260, %s262
      %p269 = scmp.eq.s32.totalorder %s42, 1
      %p270 = por %p268, %p269
      %p271 = scmp.ne.s32.totalorder %s262, %s263
      %p272 = scmp.eq.s32.totalorder %s42, 0
      %p273 = por %p271, %p272
      %p274 = scmp.ne.s32.totalorder %s262, %s263
      %p275 = scmp.eq.s32.totalorder %s43, 1
      %p276 = por %p274, %p275
      %p278 = scmp.ne.s32.totalorder %s263, %s277
      %p279 = scmp.eq.s32.totalorder %s43, 0
      %p280 = por %p278, %p279
      %s282 = sadd.s32 %s281, 1
      %p285 = scmp.eq.s32.totalorder %s37, 1
      %p286 = scmp.ne.s32.totalorder %s281, %s283
      %p287 = scmp.eq.s32.totalorder %s37, 0
      %p288 = por %p286, %p287
      %p289 = scmp.ne.s32.totalorder %s281, %s283
      %p290 = scmp.eq.s32.totalorder %s42, 1
      %p291 = por %p289, %p290
      %p292 = scmp.ne.s32.totalorder %s283, %s284
      %p293 = scmp.eq.s32.totalorder %s42, 0
      %p294 = por %p292, %p293
      %p295 = scmp.ne.s32.totalorder %s283, %s284
      %p296 = scmp.eq.s32.totalorder %s43, 1
      %p297 = por %p295, %p296
      %p299 = scmp.ne.s32.totalorder %s284, %s298
      %p300 = scmp.eq.s32.totalorder %s43, 0
      %p301 = por %p299, %p300
      %s303 = sadd.s32 %s302, 1
      %p306 = scmp.eq.s32.totalorder %s37, 1
      %p307 = scmp.ne.s32.totalorder %s302, %s304
      %p308 = scmp.eq.s32.totalorder %s37, 0
      %p309 = por %p307, %p308
      %p310 = scmp.ne.s32.totalorder %s302, %s304
      %p311 = scmp.eq.s32.totalorder %s42, 1
      %p312 = por %p310, %p311
      %p313 = scmp.ne.s32.totalorder %s304, %s305
      %p314 = scmp.eq.s32.totalorder %s42, 0
      %p315 = por %p313, %p314
      %p316 = scmp.ne.s32.totalorder %s304, %s305
      %p317 = scmp.eq.s32.totalorder %s43, 1
      %p318 = por %p316, %p317
      %p320 = scmp.ne.s32.totalorder %s305, %s319
      %p321 = scmp.eq.s32.totalorder %s43, 0
      %p322 = por %p320, %p321
      %s324 = sadd.s32 %s323, 1
      %p327 = scmp.eq.s32.totalorder %s37, 1
      %p328 = scmp.ne.s32.totalorder %s323, %s325
      %p329 = scmp.eq.s32.totalorder %s37, 0
      %p330 = por %p328, %p329
      %p331 = scmp.ne.s32.totalorder %s323, %s325
      %p332 = scmp.eq.s32.totalorder %s42, 1
      %p333 = por %p331, %p332
      %p334 = scmp.ne.s32.totalorder %s325, %s326
      %p335 = scmp.eq.s32.totalorder %s42, 0
      %p336 = por %p334, %p335
      %p337 = scmp.ne.s32.totalorder %s325, %s326
      %p338 = scmp.eq.s32.totalorder %s43, 1
      %p339 = por %p337, %p338
      %p341 = scmp.ne.s32.totalorder %s326, %s340
      %p342 = scmp.eq.s32.totalorder %s43, 0
      %p343 = por %p341, %p342
      %s345 = sadd.s32 %s344, 1
      %p348 = scmp.eq.s32.totalorder %s37, 1
      %p349 = scmp.ne.s32.totalorder %s344, %s346
      %p350 = scmp.eq.s32.totalorder %s37, 0
      %p351 = por %p349, %p350
      %p352 = scmp.ne.s32.totalorder %s344, %s346
      %p353 = scmp.eq.s32.totalorder %s42, 1
      %p354 = por %p352, %p353
      %p355 = scmp.ne.s32.totalorder %s346, %s347
      %p356 = scmp.eq.s32.totalorder %s42, 0
      %p357 = por %p355, %p356
      %p358 = scmp.ne.s32.totalorder %s346, %s347
      %p359 = scmp.eq.s32.totalorder %s43, 1
      %p360 = por %p358, %p359
      %p362 = scmp.ne.s32.totalorder %s347, %s361
      %p363 = scmp.eq.s32.totalorder %s43, 0
      %p364 = por %p362, %p363
      %s366 = sadd.s32 %s365, 1
      %p369 = scmp.eq.s32.totalorder %s37, 1
      %p370 = scmp.ne.s32.totalorder %s365, %s367
      %p371 = scmp.eq.s32.totalorder %s37, 0
      %p372 = por %p370, %p371
      %p373 = scmp.ne.s32.totalorder %s365, %s367
      %p374 = scmp.eq.s32.totalorder %s42, 1
      %p375 = por %p373, %p374
      %p376 = scmp.ne.s32.totalorder %s367, %s368
      %p377 = scmp.eq.s32.totalorder %s42, 0
      %p378 = por %p376, %p377
      %p379 = scmp.ne.s32.totalorder %s367, %s368
      %p380 = scmp.eq.s32.totalorder %s43, 1
      %p381 = por %p379, %p380
      %p383 = scmp.ne.s32.totalorder %s368, %s382
      %p384 = scmp.eq.s32.totalorder %s43, 0
      %p385 = por %p383, %p384
      %s387 = sadd.s32 %s386, 1
      %p390 = scmp.eq.s32.totalorder %s37, 1
      %p391 = scmp.ne.s32.totalorder %s386, %s388
      %p392 = scmp.eq.s32.totalorder %s37, 0
      %p393 = por %p391, %p392
      %p394 = scmp.ne.s32.totalorder %s386, %s388
      %p395 = scmp.eq.s32.totalorder %s42, 1
      %p396 = por %p394, %p395
      %p397 = scmp.ne.s32.totalorder %s388, %s389
      %p398 = scmp.eq.s32.totalorder %s42, 0
      %p399 = por %p397, %p398
      %p400 = scmp.ne.s32.totalorder %s388, %s389
      %p401 = scmp.eq.s32.totalorder %s43, 1
      %p402 = por %p400, %p401
      %p404 = scmp.ne.s32.totalorder %s389, %s403
      %p405 = scmp.eq.s32.totalorder %s43, 0
      %p406 = por %p404, %p405
      %s407 = ssub.s32 %s37, %s44
      %p408 = scmp.eq.s32.totalorder %s407, 0
      %s410 = sadd.s32 %s409, 1
      %s411 = scalar_select %p408, %s409, %s410
      %p414 = pneg %p408
      %p415 = scmp.eq.s32.totalorder %s37, 1
      %p416 = por %p414, %p415
      %p417 = scmp.ne.s32.totalorder %s409, %s412
      %p418 = scmp.eq.s32.totalorder %s37, 0
      %p419 = por %p417, %p418
      %p420 = scmp.ne.s32.totalorder %s409, %s412
      %p421 = scmp.eq.s32.totalorder %s42, 1
      %p422 = por %p420, %p421
      %p423 = scmp.ne.s32.totalorder %s412, %s413
      %p424 = scmp.eq.s32.totalorder %s42, 0
      %p425 = por %p423, %p424
      %p426 = scmp.ne.s32.totalorder %s412, %s413
      %p427 = scmp.eq.s32.totalorder %s43, 1
      %p428 = por %p426, %p427
      %p430 = scmp.ne.s32.totalorder %s413, %s429
      %p431 = scmp.eq.s32.totalorder %s43, 0
      %p432 = por %p430, %p431
      %p433 = scmp.le.s32.totalorder 1, %s37
      %p434 = scmp.lt.s32.totalorder %s37, 3
      %p435 = pnand %p433, %p434
      %p436 = pneg %p435
      // Predicated region
      $region9: #{tpu_custom_call.1} parent=5 // pred_check
        _
      $region10: #{tpu_custom_call.1} parent=5 // pred_check_branch
        %438 = sbr.rel (%p435) target = $region12
      $region11: #{tpu_custom_call.1} parent=5 // pred_region
        %s439 = ssub.s32 %s37, 1
        // Predicated region
        $region13: #{tpu_custom_call.1} parent=11 // pred_check
          %p440 = pneg %p84
        $region14: #{tpu_custom_call.1} parent=11 // pred_check_branch
          %442 = sbr.rel (%p440) target = $region16
        $region15: #{tpu_custom_call.1} parent=11 // pred_region
          %s444 = ssub.s32 6272, 6272
          %445 = vsyncadd [#allocation6], %s444
          %s446 = sshll.u32 [#allocation5], 4
          %s447 = int_to_ptr.vmem [resolvable:$true] %s446
          %452 = dma.hbm_to_vmem [thread:$0]  %s1, 6272, %s447, [#allocation6], 64, 64, 4
        $region16: #{tpu_custom_call.1} parent=11 // pred_fallthru
          _
        // Predicated region
        $region17: #{tpu_custom_call.1} parent=11 // pred_check
          %p453 = pneg %p105
        $region18: #{tpu_custom_call.1} parent=11 // pred_check_branch
          %455 = sbr.rel (%p453) target = $region20
        $region19: #{tpu_custom_call.1} parent=11 // pred_region
          %s457 = ssub.s32 16, 16
          %458 = vsyncadd [#allocation6], %s457
          %s460 = sshll.u32 [#allocation7], 4
          %s461 = int_to_ptr.vmem [resolvable:$true] %s460
          %463 = dma.hbm_to_vmem [thread:$0]  %s2, 16, %s461, [#allocation6]
        $region20: #{tpu_custom_call.1} parent=11 // pred_fallthru
          _
        // Predicated region
        $region21: #{tpu_custom_call.1} parent=11 // pred_check
          %p464 = pneg %p126
        $region22: #{tpu_custom_call.1} parent=11 // pred_check_branch
          %466 = sbr.rel (%p464) target = $region24
        $region23: #{tpu_custom_call.1} parent=11 // pred_region
          %s468 = ssub.s32 1024, 1024
          %469 = vsyncadd [#allocation9], %s468
          %s470 = sshll.u32 [#allocation8], 4
          %s471 = int_to_ptr.vmem [resolvable:$true] %s470
          %476 = dma.hbm_to_vmem [thread:$0]  %s3, 1024, %s471, [#allocation9], 64, 64, 4
        $region24: #{tpu_custom_call.1} parent=11 // pred_fallthru
          _
        // Predicated region
        $region25: #{tpu_custom_call.1} parent=11 // pred_check
          %p477 = pneg %p147
        $region26: #{tpu_custom_call.1} parent=11 // pred_check_branch
          %479 = sbr.rel (%p477) target = $region28
        $region27: #{tpu_custom_call.1} parent=11 // pred_region
          %s481 = ssub.s32 16, 16
          %482 = vsyncadd [#allocation9], %s481
          %s484 = sshll.u32 [#allocation10], 4
          %s485 = int_to_ptr.vmem [resolvable:$true] %s484
          %487 = dma.hbm_to_vmem [thread:$0]  %s4, 16, %s485, [#allocation9]
        $region28: #{tpu_custom_call.1} parent=11 // pred_fallthru
          _
        // Predicated region
        $region29: #{tpu_custom_call.1} parent=11 // pred_check
          %p488 = pneg %p168
        $region30: #{tpu_custom_call.1} parent=11 // pred_check_branch
          %490 = sbr.rel (%p488) target = $region32
        $region31: #{tpu_custom_call.1} parent=11 // pred_region
          %s492 = ssub.s32 512, 512
          %493 = vsyncadd [#allocation12], %s492
          %s494 = sshll.u32 [#allocation11], 4
          %s495 = int_to_ptr.vmem [resolvable:$true] %s494
          %500 = dma.hbm_to_vmem [thread:$0]  %s5, 512, %s495, [#allocation12], 64, 64, 4
        $region32: #{tpu_custom_call.1} parent=11 // pred_fallthru
          _
        // Predicated region
        $region33: #{tpu_custom_call.1} parent=11 // pred_check
          %p501 = pneg %p189
        $region34: #{tpu_custom_call.1} parent=11 // pred_check_branch
          %503 = sbr.rel (%p501) target = $region36
        $region35: #{tpu_custom_call.1} parent=11 // pred_region
          %s505 = ssub.s32 16, 16
          %506 = vsyncadd [#allocation12], %s505
          %s508 = sshll.u32 [#allocation13], 4
          %s509 = int_to_ptr.vmem [resolvable:$true] %s508
          %511 = dma.hbm_to_vmem [thread:$0]  %s6, 16, %s509, [#allocation12]
        $region36: #{tpu_custom_call.1} parent=11 // pred_fallthru
          _
        // Predicated region
        $region37: #{tpu_custom_call.1} parent=11 // pred_check
          %p512 = pneg %p210
        $region38: #{tpu_custom_call.1} parent=11 // pred_check_branch
          %514 = sbr.rel (%p512) target = $region40
        $region39: #{tpu_custom_call.1} parent=11 // pred_region
          %s516 = ssub.s32 128, 128
          %517 = vsyncadd [#allocation15], %s516
          %s518 = sshll.u32 [#allocation14], 4
          %s519 = int_to_ptr.vmem [resolvable:$true] %s518
          %524 = dma.hbm_to_vmem [thread:$0]  %s7, 128, %s519, [#allocation15], 64, 64, 4
        $region40: #{tpu_custom_call.1} parent=11 // pred_fallthru
          _
        // Predicated region
        $region41: #{tpu_custom_call.1} parent=11 // pred_check
          %p525 = pneg %p231
        $region42: #{tpu_custom_call.1} parent=11 // pred_check_branch
          %527 = sbr.rel (%p525) target = $region44
        $region43: #{tpu_custom_call.1} parent=11 // pred_region
          %s529 = ssub.s32 16, 16
          %530 = vsyncadd [#allocation15], %s529
          %s532 = sshll.u32 [#allocation16], 4
          %s533 = int_to_ptr.vmem [resolvable:$true] %s532
          %535 = dma.hbm_to_vmem [thread:$0]  %s8, 16, %s533, [#allocation15]
        $region44: #{tpu_custom_call.1} parent=11 // pred_fallthru
          _
        // Predicated region
        $region45: #{tpu_custom_call.1} parent=11 // pred_check
          %p536 = pneg %p252
        $region46: #{tpu_custom_call.1} parent=11 // pred_check_branch
          %538 = sbr.rel (%p536) target = $region48
        $region47: #{tpu_custom_call.1} parent=11 // pred_region
          %s540 = ssub.s32 32, 32
          %541 = vsyncadd [#allocation18], %s540
          %s543 = sshll.u32 [#allocation17], 4
          %s544 = int_to_ptr.vmem [resolvable:$true] %s543
          %546 = dma.hbm_to_vmem [thread:$0]  %s9, 32, %s544, [#allocation18]
        $region48: #{tpu_custom_call.1} parent=11 // pred_fallthru
          _
        // Predicated region
        $region49: #{tpu_custom_call.1} parent=11 // pred_check
          %p547 = pneg %p273
        $region50: #{tpu_custom_call.1} parent=11 // pred_check_branch
          %549 = sbr.rel (%p547) target = $region52
        $region51: #{tpu_custom_call.1} parent=11 // pred_region
          %s551 = ssub.s32 16, 16
          %552 = vsyncadd [#allocation18], %s551
          %s554 = sshll.u32 [#allocation19], 4
          %s555 = int_to_ptr.vmem [resolvable:$true] %s554
          %557 = dma.hbm_to_vmem [thread:$0]  %s10, 16, %s555, [#allocation18]
        $region52: #{tpu_custom_call.1} parent=11 // pred_fallthru
          _
        // Predicated region
        $region53: #{tpu_custom_call.1} parent=11 // pred_check
          %p558 = pneg %p294
        $region54: #{tpu_custom_call.1} parent=11 // pred_check_branch
          %560 = sbr.rel (%p558) target = $region56
        $region55: #{tpu_custom_call.1} parent=11 // pred_region
          %s562 = ssub.s32 128, 128
          %563 = vsyncadd [#allocation21], %s562
          %s564 = sshll.u32 [#allocation20], 4
          %s565 = int_to_ptr.vmem [resolvable:$true] %s564
          %570 = dma.hbm_to_vmem [thread:$0]  %s11, 128, %s565, [#allocation21], 64, 64, 4
        $region56: #{tpu_custom_call.1} parent=11 // pred_fallthru
          _
        // Predicated region
        $region57: #{tpu_custom_call.1} parent=11 // pred_check
          %p571 = pneg %p315
        $region58: #{tpu_custom_call.1} parent=11 // pred_check_branch
          %573 = sbr.rel (%p571) target = $region60
        $region59: #{tpu_custom_call.1} parent=11 // pred_region
          %s575 = ssub.s32 16, 16
          %576 = vsyncadd [#allocation21], %s575
          %s578 = sshll.u32 [#allocation22], 4
          %s579 = int_to_ptr.vmem [resolvable:$true] %s578
          %581 = dma.hbm_to_vmem [thread:$0]  %s12, 16, %s579, [#allocation21]
        $region60: #{tpu_custom_call.1} parent=11 // pred_fallthru
          _
        // Predicated region
        $region61: #{tpu_custom_call.1} parent=11 // pred_check
          %p582 = pneg %p336
        $region62: #{tpu_custom_call.1} parent=11 // pred_check_branch
          %584 = sbr.rel (%p582) target = $region64
        $region63: #{tpu_custom_call.1} parent=11 // pred_region
          %s586 = ssub.s32 512, 512
          %587 = vsyncadd [#allocation24], %s586
          %s588 = sshll.u32 [#allocation23], 4
          %s589 = int_to_ptr.vmem [resolvable:$true] %s588
          %594 = dma.hbm_to_vmem [thread:$0]  %s13, 512, %s589, [#allocation24], 64, 64, 4
        $region64: #{tpu_custom_call.1} parent=11 // pred_fallthru
          _
        // Predicated region
        $region65: #{tpu_custom_call.1} parent=11 // pred_check
          %p595 = pneg %p357
        $region66: #{tpu_custom_call.1} parent=11 // pred_check_branch
          %597 = sbr.rel (%p595) target = $region68
        $region67: #{tpu_custom_call.1} parent=11 // pred_region
          %s599 = ssub.s32 16, 16
          %600 = vsyncadd [#allocation24], %s599
          %s602 = sshll.u32 [#allocation25], 4
          %s603 = int_to_ptr.vmem [resolvable:$true] %s602
          %605 = dma.hbm_to_vmem [thread:$0]  %s14, 16, %s603, [#allocation24]
        $region68: #{tpu_custom_call.1} parent=11 // pred_fallthru
          _
        // Predicated region
        $region69: #{tpu_custom_call.1} parent=11 // pred_check
          %p606 = pneg %p378
        $region70: #{tpu_custom_call.1} parent=11 // pred_check_branch
          %608 = sbr.rel (%p606) target = $region72
        $region71: #{tpu_custom_call.1} parent=11 // pred_region
          %s610 = ssub.s32 7168, 7168
          %611 = vsyncadd [#allocation27], %s610
          %s612 = sshll.u32 [#allocation26], 4
          %s613 = int_to_ptr.vmem [resolvable:$true] %s612
          %618 = dma.hbm_to_vmem [thread:$0]  %s15, 7168, %s613, [#allocation27], 448, 448, 28
        $region72: #{tpu_custom_call.1} parent=11 // pred_fallthru
          _
        // Predicated region
        $region73: #{tpu_custom_call.1} parent=11 // pred_check
          %p619 = pneg %p399
        $region74: #{tpu_custom_call.1} parent=11 // pred_check_branch
          %621 = sbr.rel (%p619) target = $region76
        $region75: #{tpu_custom_call.1} parent=11 // pred_region
          %s623 = ssub.s32 112, 112
          %624 = vsyncadd [#allocation27], %s623
          %s626 = sshll.u32 [#allocation28], 4
          %s627 = int_to_ptr.vmem [resolvable:$true] %s626
          %629 = dma.hbm_to_vmem [thread:$0]  %s16, 112, %s627, [#allocation27]
        $region76: #{tpu_custom_call.1} parent=11 // pred_fallthru
          _
      $region12: #{tpu_custom_call.1} parent=5 // pred_fallthru
        _
      %p630 = scmp.lt.s32.totalorder %s37, 2
      // Predicated region
      $region77: #{tpu_custom_call.1} parent=5 // pred_check
        %p631 = pneg %p630
      $region78: #{tpu_custom_call.1} parent=5 // pred_check_branch
        %633 = sbr.rel (%p631) target = $region80
      $region79: #{tpu_custom_call.1} parent=5 // pred_region
        // Predicated region
        $region81: #{tpu_custom_call.1} parent=79 // pred_check
          %p634 = pneg %p57
        $region82: #{tpu_custom_call.1} parent=79 // pred_check_branch
          %636 = sbr.rel (%p634) target = $region84
        $region83: #{tpu_custom_call.1} parent=79 // pred_region
          %s637 = sand.u32 %s47, 1
          %s638 = scalar_lea.sflag [#allocation3], %s637
          %s639 = sand.u32 %s47, 1
          %s640 = smul.addr %s639, 112
          %s641 = scalar_lea.vmem [#allocation2], %s640
          %s642 = smul.u32 2, %s37
          %s644 = ssub.s32 1792, 1792
          %645 = vsyncadd %s638, %s644
          %s646 = smul.addr %s642, 7
          %s647 = smul.addr %s646, 128
          %s648 = scalar_lea.hbm %s0, %s647
          %s649 = sshll.u32 %s641, 4
          %s650 = int_to_ptr.vmem [resolvable:$true] %s649
          %655 = dma.hbm_to_vmem [thread:$0]  %s648, 1792, %s650, %s638, 896, 896, 56
        $region84: #{tpu_custom_call.1} parent=79 // pred_fallthru
          _
      $region80: #{tpu_custom_call.1} parent=5 // pred_fallthru
        _
      %p656 = scmp.le.s32.totalorder 1, %s37
      %p657 = scmp.lt.s32.totalorder %s37, 3
      %p658 = pnand %p656, %p657
      %p659 = pneg %p658
      // Predicated region
      $region85: #{tpu_custom_call.1} parent=5 // pred_check
        _
      $region86: #{tpu_custom_call.1} parent=5 // pred_check_branch
        %661 = sbr.rel (%p658) target = $region88
      $region87: #{tpu_custom_call.1} parent=5 // pred_region
        %s662 = ssub.s32 %s37, 1
        %s663 = sand.u32 %s50, 1
        %s664 = scalar_lea.sflag [#allocation3], %s663
        %s665 = sand.u32 %s50, 1
        %s666 = smul.addr %s665, 112
        %s667 = scalar_lea.vmem [#allocation2], %s666
        // Predicated region
        $region89: #{tpu_custom_call.1} parent=87 // pred_check
          %p668 = pneg %p63
        $region90: #{tpu_custom_call.1} parent=87 // pred_check_branch
          %670 = sbr.rel (%p668) target = $region92
        $region91: #{tpu_custom_call.1} parent=87 // pred_region
          %671 = dma.done %s664, 1792
        $region92: #{tpu_custom_call.1} parent=87 // pred_fallthru
          _
        // Predicated region
        $region93: #{tpu_custom_call.1} parent=87 // pred_check
          %p672 = pneg %p84
        $region94: #{tpu_custom_call.1} parent=87 // pred_check_branch
          %674 = sbr.rel (%p672) target = $region96
        $region95: #{tpu_custom_call.1} parent=87 // pred_region
          %675 = dma.done [#allocation6], 6272
        $region96: #{tpu_custom_call.1} parent=87 // pred_fallthru
          _
        // Predicated region
        $region97: #{tpu_custom_call.1} parent=87 // pred_check
          %p676 = pneg %p105
        $region98: #{tpu_custom_call.1} parent=87 // pred_check_branch
          %678 = sbr.rel (%p676) target = $region100
        $region99: #{tpu_custom_call.1} parent=87 // pred_region
          %679 = dma.done [#allocation6], 16
        $region100: #{tpu_custom_call.1} parent=87 // pred_fallthru
          _
        // Predicated region
        $region101: #{tpu_custom_call.1} parent=87 // pred_check
          %p680 = pneg %p126
        $region102: #{tpu_custom_call.1} parent=87 // pred_check_branch
          %682 = sbr.rel (%p680) target = $region104
        $region103: #{tpu_custom_call.1} parent=87 // pred_region
          %683 = dma.done [#allocation9], 1024
        $region104: #{tpu_custom_call.1} parent=87 // pred_fallthru
          _
        // Predicated region
        $region105: #{tpu_custom_call.1} parent=87 // pred_check
          %p684 = pneg %p147
        $region106: #{tpu_custom_call.1} parent=87 // pred_check_branch
          %686 = sbr.rel (%p684) target = $region108
        $region107: #{tpu_custom_call.1} parent=87 // pred_region
          %687 = dma.done [#allocation9], 16
        $region108: #{tpu_custom_call.1} parent=87 // pred_fallthru
          _
        // Predicated region
        $region109: #{tpu_custom_call.1} parent=87 // pred_check
          %p688 = pneg %p168
        $region110: #{tpu_custom_call.1} parent=87 // pred_check_branch
          %690 = sbr.rel (%p688) target = $region112
        $region111: #{tpu_custom_call.1} parent=87 // pred_region
          %691 = dma.done [#allocation12], 512
        $region112: #{tpu_custom_call.1} parent=87 // pred_fallthru
          _
        // Predicated region
        $region113: #{tpu_custom_call.1} parent=87 // pred_check
          %p692 = pneg %p189
        $region114: #{tpu_custom_call.1} parent=87 // pred_check_branch
          %694 = sbr.rel (%p692) target = $region116
        $region115: #{tpu_custom_call.1} parent=87 // pred_region
          %695 = dma.done [#allocation12], 16
        $region116: #{tpu_custom_call.1} parent=87 // pred_fallthru
          _
        // Predicated region
        $region117: #{tpu_custom_call.1} parent=87 // pred_check
          %p696 = pneg %p210
        $region118: #{tpu_custom_call.1} parent=87 // pred_check_branch
          %698 = sbr.rel (%p696) target = $region120
        $region119: #{tpu_custom_call.1} parent=87 // pred_region
          %699 = dma.done [#allocation15], 128
        $region120: #{tpu_custom_call.1} parent=87 // pred_fallthru
          _
        // Predicated region
        $region121: #{tpu_custom_call.1} parent=87 // pred_check
          %p700 = pneg %p231
        $region122: #{tpu_custom_call.1} parent=87 // pred_check_branch
          %702 = sbr.rel (%p700) target = $region124
        $region123: #{tpu_custom_call.1} parent=87 // pred_region
          %703 = dma.done [#allocation15], 16
        $region124: #{tpu_custom_call.1} parent=87 // pred_fallthru
          _
        // Predicated region
        $region125: #{tpu_custom_call.1} parent=87 // pred_check
          %p704 = pneg %p252
        $region126: #{tpu_custom_call.1} parent=87 // pred_check_branch
          %706 = sbr.rel (%p704) target = $region128
        $region127: #{tpu_custom_call.1} parent=87 // pred_region
          %707 = dma.done [#allocation18], 32
        $region128: #{tpu_custom_call.1} parent=87 // pred_fallthru
          _
        // Predicated region
        $region129: #{tpu_custom_call.1} parent=87 // pred_check
          %p708 = pneg %p273
        $region130: #{tpu_custom_call.1} parent=87 // pred_check_branch
          %710 = sbr.rel (%p708) target = $region132
        $region131: #{tpu_custom_call.1} parent=87 // pred_region
          %711 = dma.done [#allocation18], 16
        $region132: #{tpu_custom_call.1} parent=87 // pred_fallthru
          _
        // Predicated region
        $region133: #{tpu_custom_call.1} parent=87 // pred_check
          %p712 = pneg %p294
        $region134: #{tpu_custom_call.1} parent=87 // pred_check_branch
          %714 = sbr.rel (%p712) target = $region136
        $region135: #{tpu_custom_call.1} parent=87 // pred_region
          %715 = dma.done [#allocation21], 128
        $region136: #{tpu_custom_call.1} parent=87 // pred_fallthru
          _
        // Predicated region
        $region137: #{tpu_custom_call.1} parent=87 // pred_check
          %p716 = pneg %p315
        $region138: #{tpu_custom_call.1} parent=87 // pred_check_branch
          %718 = sbr.rel (%p716) target = $region140
        $region139: #{tpu_custom_call.1} parent=87 // pred_region
          %719 = dma.done [#allocation21], 16
        $region140: #{tpu_custom_call.1} parent=87 // pred_fallthru
          _
        // Predicated region
        $region141: #{tpu_custom_call.1} parent=87 // pred_check
          %p720 = pneg %p336
        $region142: #{tpu_custom_call.1} parent=87 // pred_check_branch
          %722 = sbr.rel (%p720) target = $region144
        $region143: #{tpu_custom_call.1} parent=87 // pred_region
          %723 = dma.done [#allocation24], 512
        $region144: #{tpu_custom_call.1} parent=87 // pred_fallthru
          _
        // Predicated region
        $region145: #{tpu_custom_call.1} parent=87 // pred_check
          %p724 = pneg %p357
        $region146: #{tpu_custom_call.1} parent=87 // pred_check_branch
          %726 = sbr.rel (%p724) target = $region148
        $region147: #{tpu_custom_call.1} parent=87 // pred_region
          %727 = dma.done [#allocation24], 16
        $region148: #{tpu_custom_call.1} parent=87 // pred_fallthru
          _
        // Predicated region
        $region149: #{tpu_custom_call.1} parent=87 // pred_check
          %p728 = pneg %p378
        $region150: #{tpu_custom_call.1} parent=87 // pred_check_branch
          %730 = sbr.rel (%p728) target = $region152
        $region151: #{tpu_custom_call.1} parent=87 // pred_region
          %731 = dma.done [#allocation27], 7168
        $region152: #{tpu_custom_call.1} parent=87 // pred_fallthru
          _
        // Predicated region
        $region153: #{tpu_custom_call.1} parent=87 // pred_check
          %p732 = pneg %p399
        $region154: #{tpu_custom_call.1} parent=87 // pred_check_branch
          %734 = sbr.rel (%p732) target = $region156
        $region155: #{tpu_custom_call.1} parent=87 // pred_region
          %735 = dma.done [#allocation27], 112
        $region156: #{tpu_custom_call.1} parent=87 // pred_fallthru
          _
        %s736 = sand.u32 %s50, 1
        %s737 = scalar_lea.sflag [#allocation3], %s736
        %s738 = sand.u32 %s50, 1
        %s739 = smul.addr %s738, 112
        %s740 = scalar_lea.vmem [#allocation2], %s739
        %p741 = pneg %p63
        %p742 = pneg %p60
        %p743 = pneg %p84
        %p744 = pneg %p81
        %p745 = pneg %p105
        %p746 = pneg %p102
        %p747 = pneg %p126
        %p748 = pneg %p123
        %p749 = pneg %p147
        %p750 = pneg %p144
        %p751 = pneg %p168
        %p752 = pneg %p165
        %p753 = pneg %p189
        %p754 = pneg %p186
        %p755 = pneg %p210
        %p756 = pneg %p207
        %p757 = pneg %p231
        %p758 = pneg %p228
        %p759 = pneg %p252
        %p760 = pneg %p249
        %p761 = pneg %p273
        %p762 = pneg %p270
        %p763 = pneg %p294
        %p764 = pneg %p291
        %p765 = pneg %p315
        %p766 = pneg %p312
        %p767 = pneg %p336
        %p768 = pneg %p333
        %p769 = pneg %p357
        %p770 = pneg %p354
        %p771 = pneg %p378
        %p772 = pneg %p375
        %p773 = pneg %p399
        %p774 = pneg %p396
        %p775 = pneg %p425
        %p776 = pneg %p422
        %s777 = sand.u32 %s412, 1
        %s778 = scalar_lea.sflag [#allocation4], %s777
        %s779 = sand.u32 %s412, 1
        %s780 = smul.addr %s779, 56
        %s781 = scalar_lea.vmem [#allocation29], %s780
        %s782 = smul.u32 2, %s42
        %s783 = smul.u32 2, %s42
        %v785 = vld [vmem:[%s667] sm:$0xff]
        %v786 = vld [vmem:[%s667 + $0x8] sm:$0xff]
        %v787 = vld [vmem:[%s667 + $0x10] sm:$0xff]
        %v788 = vld [vmem:[%s667 + $0x18] sm:$0xff]
        %v789 = vld [vmem:[%s667 + $0x20] sm:$0xff]
        %v790 = vld [vmem:[%s667 + $0x28] sm:$0xff]
        %v791 = vld [vmem:[%s667 + $0x30] sm:$0xff]
        %v792 = vld [vmem:[%s667 + $0x38] sm:$0xff]
        %v793 = vld [vmem:[%s667 + $0x40] sm:$0xff]
        %v794 = vld [vmem:[%s667 + $0x48] sm:$0xff]
        %v795 = vld [vmem:[%s667 + $0x50] sm:$0xff]
        %v796 = vld [vmem:[%s667 + $0x58] sm:$0xff]
        %v797 = vld [vmem:[%s667 + $0x60] sm:$0xff]
        %v798 = vld [vmem:[%s667 + $0x68] sm:$0xff]
        %v799 = vpack.c.bf16 %v792, %v785
        %v800 = vpack.c.bf16 %v793, %v786
        %v801 = vpack.c.bf16 %v794, %v787
        %v802 = vpack.c.bf16 %v795, %v788
        %v803 = vpack.c.bf16 %v796, %v789
        %v804 = vpack.c.bf16 %v797, %v790
        %v805 = vpack.c.bf16 %v798, %v791
        %v806 = vld [vmem:[#allocation5] sm:$0xf]
        %v807 = vld [vmem:[#allocation5 + $0x4] sm:$0xf]
        %v808 = vld [vmem:[#allocation5 + $0x8] sm:$0xf]
        %v809 = vld [vmem:[#allocation5 + $0xc] sm:$0xf]
        %v810 = vld [vmem:[#allocation5 + $0x10] sm:$0xf]
        %v811 = vld [vmem:[#allocation5 + $0x14] sm:$0xf]
        %v812 = vld [vmem:[#allocation5 + $0x18] sm:$0xf]
        %v813 = vld [vmem:[#allocation5 + $0x1c] sm:$0xf]
        %v814 = vld [vmem:[#allocation5 + $0x20] sm:$0xf]
        %v815 = vld [vmem:[#allocation5 + $0x24] sm:$0xf]
        %v816 = vld [vmem:[#allocation5 + $0x28] sm:$0xf]
        %v817 = vld [vmem:[#allocation5 + $0x2c] sm:$0xf]
        %v818 = vld [vmem:[#allocation5 + $0x30] sm:$0xf]
        %v819 = vld [vmem:[#allocation5 + $0x34] sm:$0xf]
        %v820 = vld [vmem:[#allocation5 + $0x38] sm:$0xf]
        %v821 = vld [vmem:[#allocation5 + $0x3c] sm:$0xf]
        %v822 = vld [vmem:[#allocation5 + $0x40] sm:$0xf]
        %v823 = vld [vmem:[#allocation5 + $0x44] sm:$0xf]
        %v824 = vld [vmem:[#allocation5 + $0x48] sm:$0xf]
        %v825 = vld [vmem:[#allocation5 + $0x4c] sm:$0xf]
        %v826 = vld [vmem:[#allocation5 + $0x50] sm:$0xf]
        %v827 = vld [vmem:[#allocation5 + $0x54] sm:$0xf]
        %v828 = vld [vmem:[#allocation5 + $0x58] sm:$0xf]
        %v829 = vld [vmem:[#allocation5 + $0x5c] sm:$0xf]
        %v830 = vld [vmem:[#allocation5 + $0x60] sm:$0xf]
        %v831 = vld [vmem:[#allocation5 + $0x64] sm:$0xf]
        %v832 = vld [vmem:[#allocation5 + $0x68] sm:$0xf]
        %v833 = vld [vmem:[#allocation5 + $0x6c] sm:$0xf]
        %v834 = vld [vmem:[#allocation5 + $0x70] sm:$0xf]
        %v835 = vld [vmem:[#allocation5 + $0x74] sm:$0xf]
        %v836 = vld [vmem:[#allocation5 + $0x78] sm:$0xf]
        %v837 = vld [vmem:[#allocation5 + $0x7c] sm:$0xf]
        %v838 = vld [vmem:[#allocation5 + $0x80] sm:$0xf]
        %v839 = vld [vmem:[#allocation5 + $0x84] sm:$0xf]
        %v840 = vld [vmem:[#allocation5 + $0x88] sm:$0xf]
        %v841 = vld [vmem:[#allocation5 + $0x8c] sm:$0xf]
        %v842 = vld [vmem:[#allocation5 + $0x90] sm:$0xf]
        %v843 = vld [vmem:[#allocation5 + $0x94] sm:$0xf]
        %v844 = vld [vmem:[#allocation5 + $0x98] sm:$0xf]
        %v845 = vld [vmem:[#allocation5 + $0x9c] sm:$0xf]
        %v846 = vld [vmem:[#allocation5 + $0xa0] sm:$0xf]
        %v847 = vld [vmem:[#allocation5 + $0xa4] sm:$0xf]
        %v848 = vld [vmem:[#allocation5 + $0xa8] sm:$0xf]
        %v849 = vld [vmem:[#allocation5 + $0xac] sm:$0xf]
        %v850 = vld [vmem:[#allocation5 + $0xb0] sm:$0xf]
        %v851 = vld [vmem:[#allocation5 + $0xb4] sm:$0xf]
        %v852 = vld [vmem:[#allocation5 + $0xb8] sm:$0xf]
        %v853 = vld [vmem:[#allocation5 + $0xbc] sm:$0xf]
        %v854 = vld [vmem:[#allocation5 + $0xc0] sm:$0xf]
        %v855 = vld [vmem:[#allocation5 + $0xc4] sm:$0xf]
        %v856 = vld [vmem:[#allocation5 + $0xc8] sm:$0xf]
        %v857 = vld [vmem:[#allocation5 + $0xcc] sm:$0xf]
        %v858 = vld [vmem:[#allocation5 + $0xd0] sm:$0xf]
        %v859 = vld [vmem:[#allocation5 + $0xd4] sm:$0xf]
        %v860 = vld [vmem:[#allocation5 + $0xd8] sm:$0xf]
        %v861 = vld [vmem:[#allocation5 + $0xdc] sm:$0xf]
        %v862 = vld [vmem:[#allocation5 + $0xe0] sm:$0xf]
        %v863 = vld [vmem:[#allocation5 + $0xe4] sm:$0xf]
        %v864 = vld [vmem:[#allocation5 + $0xe8] sm:$0xf]
        %v865 = vld [vmem:[#allocation5 + $0xec] sm:$0xf]
        %v866 = vld [vmem:[#allocation5 + $0xf0] sm:$0xf]
        %v867 = vld [vmem:[#allocation5 + $0xf4] sm:$0xf]
        %v868 = vld [vmem:[#allocation5 + $0xf8] sm:$0xf]
        %v869 = vld [vmem:[#allocation5 + $0xfc] sm:$0xf]
        %v870 = vld [vmem:[#allocation5 + $0x100] sm:$0xf]
        %v871 = vld [vmem:[#allocation5 + $0x104] sm:$0xf]
        %v872 = vld [vmem:[#allocation5 + $0x108] sm:$0xf]
        %v873 = vld [vmem:[#allocation5 + $0x10c] sm:$0xf]
        %v874 = vld [vmem:[#allocation5 + $0x110] sm:$0xf]
        %v875 = vld [vmem:[#allocation5 + $0x114] sm:$0xf]
        %v876 = vld [vmem:[#allocation5 + $0x118] sm:$0xf]
        %v877 = vld [vmem:[#allocation5 + $0x11c] sm:$0xf]
        %v878 = vld [vmem:[#allocation5 + $0x120] sm:$0xf]
        %v879 = vld [vmem:[#allocation5 + $0x124] sm:$0xf]
        %v880 = vld [vmem:[#allocation5 + $0x128] sm:$0xf]
        %v881 = vld [vmem:[#allocation5 + $0x12c] sm:$0xf]
        %v882 = vld [vmem:[#allocation5 + $0x130] sm:$0xf]
        %v883 = vld [vmem:[#allocation5 + $0x134] sm:$0xf]
        %v884 = vld [vmem:[#allocation5 + $0x138] sm:$0xf]
        %v885 = vld [vmem:[#allocation5 + $0x13c] sm:$0xf]
        %v886 = vld [vmem:[#allocation5 + $0x140] sm:$0xf]
        %v887 = vld [vmem:[#allocation5 + $0x144] sm:$0xf]
        %v888 = vld [vmem:[#allocation5 + $0x148] sm:$0xf]
        %v889 = vld [vmem:[#allocation5 + $0x14c] sm:$0xf]
        %v890 = vld [vmem:[#allocation5 + $0x150] sm:$0xf]
        %v891 = vld [vmem:[#allocation5 + $0x154] sm:$0xf]
        %v892 = vld [vmem:[#allocation5 + $0x158] sm:$0xf]
        %v893 = vld [vmem:[#allocation5 + $0x15c] sm:$0xf]
        %v894 = vld [vmem:[#allocation5 + $0x160] sm:$0xf]
        %v895 = vld [vmem:[#allocation5 + $0x164] sm:$0xf]
        %v896 = vld [vmem:[#allocation5 + $0x168] sm:$0xf]
        %v897 = vld [vmem:[#allocation5 + $0x16c] sm:$0xf]
        %v898 = vld [vmem:[#allocation5 + $0x170] sm:$0xf]
        %v899 = vld [vmem:[#allocation5 + $0x174] sm:$0xf]
        %v900 = vld [vmem:[#allocation5 + $0x178] sm:$0xf]
        %v901 = vld [vmem:[#allocation5 + $0x17c] sm:$0xf]
        %v902 = vld [vmem:[#allocation5 + $0x180] sm:$0xf]
        %v903 = vld [vmem:[#allocation5 + $0x184] sm:$0xf]
        %v1002 = vunpack.c.l.b16 %v806
        %v1003 = vunpack.c.l.b16 %v807
        %v1004 = vunpack.c.l.b16 %v808
        %v1005 = vunpack.c.l.b16 %v809
        %v1006 = vunpack.c.l.b16 %v810
        %v1007 = vunpack.c.l.b16 %v811
        %v1008 = vunpack.c.l.b16 %v812
        %v1009 = vunpack.c.l.b16 %v813
        %v1010 = vunpack.c.l.b16 %v814
        %v1011 = vunpack.c.l.b16 %v815
        %v1012 = vunpack.c.l.b16 %v816
        %v1013 = vunpack.c.l.b16 %v817
        %v1014 = vunpack.c.l.b16 %v818
        %v1015 = vunpack.c.l.b16 %v819
        %v1016 = vunpack.c.l.b16 %v820
        %v1017 = vunpack.c.l.b16 %v821
        %v1018 = vunpack.c.l.b16 %v822
        %v1019 = vunpack.c.l.b16 %v823
        %v1020 = vunpack.c.l.b16 %v824
        %v1021 = vunpack.c.l.b16 %v825
        %v1022 = vunpack.c.l.b16 %v826
        %v1023 = vunpack.c.l.b16 %v827
        %v1024 = vunpack.c.l.b16 %v828
        %v1025 = vunpack.c.l.b16 %v829
        %v1026 = vunpack.c.l.b16 %v830
        %v1027 = vunpack.c.l.b16 %v831
        %v1028 = vunpack.c.l.b16 %v832
        %v1029 = vunpack.c.l.b16 %v833
        %v1030 = vunpack.c.l.b16 %v834
        %v1031 = vunpack.c.l.b16 %v835
        %v1032 = vunpack.c.l.b16 %v836
        %v1033 = vunpack.c.l.b16 %v837
        %v1034 = vunpack.c.l.b16 %v838
        %v1035 = vunpack.c.l.b16 %v839
        %v1036 = vunpack.c.l.b16 %v840
        %v1037 = vunpack.c.l.b16 %v841
        %v1038 = vunpack.c.l.b16 %v842
        %v1039 = vunpack.c.l.b16 %v843
        %v1040 = vunpack.c.l.b16 %v844
        %v1041 = vunpack.c.l.b16 %v845
        %v1042 = vunpack.c.l.b16 %v846
        %v1043 = vunpack.c.l.b16 %v847
        %v1044 = vunpack.c.l.b16 %v848
        %v1045 = vunpack.c.l.b16 %v849
        %v1046 = vunpack.c.l.b16 %v850
        %v1047 = vunpack.c.l.b16 %v851
        %v1048 = vunpack.c.l.b16 %v852
        %v1049 = vunpack.c.l.b16 %v853
        %v1050 = vunpack.c.l.b16 %v854
        %v1051 = vunpack.c.l.b16 %v855
        %v1052 = vunpack.c.l.b16 %v856
        %v1053 = vunpack.c.l.b16 %v857
        %v1054 = vunpack.c.l.b16 %v858
        %v1055 = vunpack.c.l.b16 %v859
        %v1056 = vunpack.c.l.b16 %v860
        %v1057 = vunpack.c.l.b16 %v861
        %v1058 = vunpack.c.l.b16 %v862
        %v1059 = vunpack.c.l.b16 %v863
        %v1060 = vunpack.c.l.b16 %v864
        %v1061 = vunpack.c.l.b16 %v865
        %v1062 = vunpack.c.l.b16 %v866
        %v1063 = vunpack.c.l.b16 %v867
        %v1064 = vunpack.c.l.b16 %v868
        %v1065 = vunpack.c.l.b16 %v869
        %v1066 = vunpack.c.l.b16 %v870
        %v1067 = vunpack.c.l.b16 %v871
        %v1068 = vunpack.c.l.b16 %v872
        %v1069 = vunpack.c.l.b16 %v873
        %v1070 = vunpack.c.l.b16 %v874
        %v1071 = vunpack.c.l.b16 %v875
        %v1072 = vunpack.c.l.b16 %v876
        %v1073 = vunpack.c.l.b16 %v877
        %v1074 = vunpack.c.l.b16 %v878
        %v1075 = vunpack.c.l.b16 %v879
        %v1076 = vunpack.c.l.b16 %v880
        %v1077 = vunpack.c.l.b16 %v881
        %v1078 = vunpack.c.l.b16 %v882
        %v1079 = vunpack.c.l.b16 %v883
        %v1080 = vunpack.c.l.b16 %v884
        %v1081 = vunpack.c.l.b16 %v885
        %v1082 = vunpack.c.l.b16 %v886
        %v1083 = vunpack.c.l.b16 %v887
        %v1084 = vunpack.c.l.b16 %v888
        %v1085 = vunpack.c.l.b16 %v889
        %v1086 = vunpack.c.l.b16 %v890
        %v1087 = vunpack.c.l.b16 %v891
        %v1088 = vunpack.c.l.b16 %v892
        %v1089 = vunpack.c.l.b16 %v893
        %v1090 = vunpack.c.l.b16 %v894
        %v1091 = vunpack.c.l.b16 %v895
        %v1092 = vunpack.c.l.b16 %v896
        %v1093 = vunpack.c.l.b16 %v897
        %v1094 = vunpack.c.l.b16 %v898
        %v1095 = vunpack.c.l.b16 %v899
        %v1096 = vunpack.c.l.b16 %v900
        %v1097 = vunpack.c.l.b16 %v901
        %v1098 = vunpack.c.l.b16 %v902
        %v1099 = vunpack.c.l.b16 %v903
        %v1100 = vpack.c.b16 %v1003, %v1002
        %v1101 = vpack.c.b16 %v1005, %v1004
        %v1102 = vpack.c.b16 %v1007, %v1006
        %v1103 = vpack.c.b16 %v1009, %v1008
        %v1104 = vpack.c.b16 %v1011, %v1010
        %v1105 = vpack.c.b16 %v1013, %v1012
        %v1106 = vpack.c.b16 %v1015, %v1014
        %v1107 = vpack.c.b16 %v1017, %v1016
        %v1108 = vpack.c.b16 %v1019, %v1018
        %v1109 = vpack.c.b16 %v1021, %v1020
        %v1110 = vpack.c.b16 %v1023, %v1022
        %v1111 = vpack.c.b16 %v1025, %v1024
        %v1112 = vpack.c.b16 %v1027, %v1026
        %v1113 = vpack.c.b16 %v1029, %v1028
        %v1114 = vpack.c.b16 %v1031, %v1030
        %v1115 = vpack.c.b16 %v1033, %v1032
        %v1116 = vpack.c.b16 %v1035, %v1034
        %v1117 = vpack.c.b16 %v1037, %v1036
        %v1118 = vpack.c.b16 %v1039, %v1038
        %v1119 = vpack.c.b16 %v1041, %v1040
        %v1120 = vpack.c.b16 %v1043, %v1042
        %v1121 = vpack.c.b16 %v1045, %v1044
        %v1122 = vpack.c.b16 %v1047, %v1046
        %v1123 = vpack.c.b16 %v1049, %v1048
        %v1124 = vpack.c.b16 %v1051, %v1050
        %v1125 = vpack.c.b16 %v1053, %v1052
        %v1126 = vpack.c.b16 %v1055, %v1054
        %v1127 = vpack.c.b16 %v1057, %v1056
        %v1128 = vpack.c.b16 %v1059, %v1058
        %v1129 = vpack.c.b16 %v1061, %v1060
        %v1130 = vpack.c.b16 %v1063, %v1062
        %v1131 = vpack.c.b16 %v1065, %v1064
        %v1132 = vpack.c.b16 %v1067, %v1066
        %v1133 = vpack.c.b16 %v1069, %v1068
        %v1134 = vpack.c.b16 %v1071, %v1070
        %v1135 = vpack.c.b16 %v1073, %v1072
        %v1136 = vpack.c.b16 %v1075, %v1074
        %v1137 = vpack.c.b16 %v1077, %v1076
        %v1138 = vpack.c.b16 %v1079, %v1078
        %v1139 = vpack.c.b16 %v1081, %v1080
        %v1140 = vpack.c.b16 %v1083, %v1082
        %v1141 = vpack.c.b16 %v1085, %v1084
        %v1142 = vpack.c.b16 %v1087, %v1086
        %v1143 = vpack.c.b16 %v1089, %v1088
        %v1144 = vpack.c.b16 %v1091, %v1090
        %v1145 = vpack.c.b16 %v1093, %v1092
        %v1146 = vpack.c.b16 %v1095, %v1094
        %v1147 = vpack.c.b16 %v1097, %v1096
        %v1148 = vpack.c.b16 %v1099, %v1098
        %vm1198 = vcmask 130048
        %v1200 = vsel %vm1198, %v805, 0
        %1202 = vmatprep.subr.bf16.mxu0 0
        %1203 = vmatpush1.bf16.msra.mxu0 %v1100
        %1204 = vmatprep.subr.bf16.mxu0 0
        %1205 = vmatpush1.bf16.msra.mxu0 %v1101
        %1206 = vmatprep.subr.bf16.mxu0 0
        %1207 = vmatpush1.bf16.msra.mxu0 %v1102
        %1208 = vmatprep.subr.bf16.mxu0 0
        %1209 = vmatpush1.bf16.msra.mxu0 %v1103
        %1210 = vmatprep.subr.bf16.mxu0 0
        %1211 = vmatpush1.bf16.msra.mxu0 %v1104
        %1212 = vmatprep.subr.bf16.mxu0 0
        %1213 = vmatpush1.bf16.msra.mxu0 %v1105
        %1214 = vmatprep.subr.bf16.mxu0 0
        %1215 = vmatpush1.bf16.msra.mxu0 %v1106
        %1216 = vmatprep.subr.bf16.mxu0 0
        %1217 = vmatpush1.bf16.msra.mxu0 %v1107
        %1218 = vmatprep.subr.bf16.mxu0 0
        %1219 = vmatpush1.bf16.msra.mxu0 %v1108
        %1220 = vmatprep.subr.bf16.mxu0 0
        %1221 = vmatpush1.bf16.msra.mxu0 %v1109
        %1222 = vmatprep.subr.bf16.mxu0 0
        %1223 = vmatpush1.bf16.msra.mxu0 %v1110
        %1224 = vmatprep.subr.bf16.mxu0 0
        %1225 = vmatpush1.bf16.msra.mxu0 %v1111
        %1226 = vmatprep.subr.bf16.mxu0 0
        %1227 = vmatpush1.bf16.msra.mxu0 %v1112
        %1228 = vmatprep.subr.bf16.mxu0 0
        %1229 = vmatpush1.bf16.msra.mxu0 %v1113
        %1230 = vmatprep.subr.bf16.mxu0 0
        %1231 = vmatpush1.bf16.msra.mxu0 %v1114
        %1232 = vmatprep.subr.bf16.mxu0 0
        %1233 = vmatpush1.bf16.msra.mxu0 %v1115
        %1234 = vmatprep.mubr.bf16.mxu0 %v800
        %1235 = vmatmul.mubr.bf16.gmra.mrb[0].mxu0 %v799
        %v1236 = vpop.f32.mrb[0].mxu0
        %v1237 = vadd.f32 0.0, %v1236
        %v1238 = vpop.f32.mrb[0].mxu0
        %v1239 = vpop.f32.mrb[0].mxu0
        %v1240 = vadd.f32 0.0, %v1239
        %v1241 = vpop.f32.mrb[0].mxu0
        %1242 = vdwg.mxu0
        %1243 = vmatprep.subr.bf16.mxu0 0
        %1244 = vmatpush1.bf16.msra.mxu0 %v1116
        %1245 = vmatprep.subr.bf16.mxu0 0
        %1246 = vmatpush1.bf16.msra.mxu0 %v1117
        %1247 = vmatprep.subr.bf16.mxu0 0
        %1248 = vmatpush1.bf16.msra.mxu0 %v1118
        %1249 = vmatprep.subr.bf16.mxu0 0
        %1250 = vmatpush1.bf16.msra.mxu0 %v1119
        %1251 = vmatprep.subr.bf16.mxu0 0
        %1252 = vmatpush1.bf16.msra.mxu0 %v1120
        %1253 = vmatprep.subr.bf16.mxu0 0
        %1254 = vmatpush1.bf16.msra.mxu0 %v1121
        %1255 = vmatprep.subr.bf16.mxu0 0
        %1256 = vmatpush1.bf16.msra.mxu0 %v1122
        %1257 = vmatprep.subr.bf16.mxu0 0
        %1258 = vmatpush1.bf16.msra.mxu0 %v1123
        %1259 = vmatprep.subr.bf16.mxu0 0
        %1260 = vmatpush1.bf16.msra.mxu0 %v1124
        %1261 = vmatprep.subr.bf16.mxu0 0
        %1262 = vmatpush1.bf16.msra.mxu0 %v1125
        %1263 = vmatprep.subr.bf16.mxu0 0
        %1264 = vmatpush1.bf16.msra.mxu0 %v1126
        %1265 = vmatprep.subr.bf16.mxu0 0
        %1266 = vmatpush1.bf16.msra.mxu0 %v1127
        %1267 = vmatprep.subr.bf16.mxu0 0
        %1268 = vmatpush1.bf16.msra.mxu0 %v1128
        %1269 = vmatprep.subr.bf16.mxu0 0
        %1270 = vmatpush1.bf16.msra.mxu0 %v1129
        %1271 = vmatprep.subr.bf16.mxu0 0
        %1272 = vmatpush1.bf16.msra.mxu0 %v1130
        %1273 = vmatprep.subr.bf16.mxu0 0
        %1274 = vmatpush1.bf16.msra.mxu0 %v1131
        %1275 = vmatprep.mubr.bf16.mxu0 %v802
        %1276 = vmatmul.mubr.bf16.gmra.mrb[0].mxu0 %v801
        %v1277 = vpop.f32.mrb[0].mxu0
        %v1278 = vadd.f32 %v1237, %v1277
        %v1279 = vpop.f32.mrb[0].mxu0
        %v1280 = vpop.f32.mrb[0].mxu0
        %v1281 = vadd.f32 %v1240, %v1280
        %v1282 = vpop.f32.mrb[0].mxu0
        %1283 = vdwg.mxu0
        %1284 = vmatprep.subr.bf16.mxu0 0
        %1285 = vmatpush1.bf16.msra.mxu0 %v1132
        %1286 = vmatprep.subr.bf16.mxu0 0
        %1287 = vmatpush1.bf16.msra.mxu0 %v1133
        %1288 = vmatprep.subr.bf16.mxu0 0
        %1289 = vmatpush1.bf16.msra.mxu0 %v1134
        %1290 = vmatprep.subr.bf16.mxu0 0
        %1291 = vmatpush1.bf16.msra.mxu0 %v1135
        %1292 = vmatprep.subr.bf16.mxu0 0
        %1293 = vmatpush1.bf16.msra.mxu0 %v1136
        %1294 = vmatprep.subr.bf16.mxu0 0
        %1295 = vmatpush1.bf16.msra.mxu0 %v1137
        %1296 = vmatprep.subr.bf16.mxu0 0
        %1297 = vmatpush1.bf16.msra.mxu0 %v1138
        %1298 = vmatprep.subr.bf16.mxu0 0
        %1299 = vmatpush1.bf16.msra.mxu0 %v1139
        %1300 = vmatprep.subr.bf16.mxu0 0
        %1301 = vmatpush1.bf16.msra.mxu0 %v1140
        %1302 = vmatprep.subr.bf16.mxu0 0
        %1303 = vmatpush1.bf16.msra.mxu0 %v1141
        %1304 = vmatprep.subr.bf16.mxu0 0
        %1305 = vmatpush1.bf16.msra.mxu0 %v1142
        %1306 = vmatprep.subr.bf16.mxu0 0
        %1307 = vmatpush1.bf16.msra.mxu0 %v1143
        %1308 = vmatprep.subr.bf16.mxu0 0
        %1309 = vmatpush1.bf16.msra.mxu0 %v1144
        %1310 = vmatprep.subr.bf16.mxu0 0
        %1311 = vmatpush1.bf16.msra.mxu0 %v1145
        %1312 = vmatprep.subr.bf16.mxu0 0
        %1313 = vmatpush1.bf16.msra.mxu0 %v1146
        %1314 = vmatprep.subr.bf16.mxu0 0
        %1315 = vmatpush1.bf16.msra.mxu0 %v1147
        %1316 = vmatprep.mubr.bf16.mxu0 %v804
        %1317 = vmatmul.mubr.bf16.gmra.mrb[0].mxu0 %v803
        %v1318 = vpop.f32.mrb[0].mxu0
        %v1319 = vadd.f32 %v1278, %v1318
        %v1320 = vpop.f32.mrb[0].mxu0
        %v1321 = vpop.f32.mrb[0].mxu0
        %v1322 = vadd.f32 %v1281, %v1321
        %v1323 = vpop.f32.mrb[0].mxu0
        %1324 = vdwg.mxu0
        %1325 = vmatprep.subr.bf16.mxu0 0
        %1326 = vmatpush1.bf16.msra.mxu0 %v1148
        %1327 = vmatprep.subr.bf16.mxu0 0
        %1328 = vmatpush1.bf16.msra.mxu0 0
        %1329 = vmatprep.subr.bf16.mxu0 0
        %1330 = vmatpush1.bf16.msra.mxu0 0
        %1331 = vmatprep.subr.bf16.mxu0 0
        %1332 = vmatpush1.bf16.msra.mxu0 0
        %1333 = vmatprep.subr.bf16.mxu0 0
        %1334 = vmatpush1.bf16.msra.mxu0 0
        %1335 = vmatprep.subr.bf16.mxu0 0
        %1336 = vmatpush1.bf16.msra.mxu0 0
        %1337 = vmatprep.subr.bf16.mxu0 0
        %1338 = vmatpush1.bf16.msra.mxu0 0
        %1339 = vmatprep.subr.bf16.mxu0 0
        %1340 = vmatpush1.bf16.msra.mxu0 0
        %1341 = vmatprep.subr.bf16.mxu0 0
        %1342 = vmatpush1.bf16.msra.mxu0 0
        %1343 = vmatprep.subr.bf16.mxu0 0
        %1344 = vmatpush1.bf16.msra.mxu0 0
        %1345 = vmatprep.subr.bf16.mxu0 0
        %1346 = vmatpush1.bf16.msra.mxu0 0
        %1347 = vmatprep.subr.bf16.mxu0 0
        %1348 = vmatpush1.bf16.msra.mxu0 0
        %1349 = vmatprep.subr.bf16.mxu0 0
        %1350 = vmatpush1.bf16.msra.mxu0 0
        %1351 = vmatprep.subr.bf16.mxu0 0
        %1352 = vmatpush1.bf16.msra.mxu0 0
        %1353 = vmatprep.subr.bf16.mxu0 0
        %1354 = vmatpush1.bf16.msra.mxu0 0
        %1355 = vmatprep.subr.bf16.mxu0 0
        %1356 = vmatpush1.bf16.msra.mxu0 0
        %1357 = vmatprep.mubr.bf16.mxu0 0
        %1358 = vmatmul.mubr.bf16.gmra.mrb[0].mxu0 %v1200
        %v1359 = vpop.f32.mrb[0].mxu0
        %v1360 = vadd.f32 %v1319, %v1359
        %v1361 = vpop.f32.mrb[0].mxu0
        %v1362 = vpop.f32.mrb[0].mxu0
        %v1363 = vadd.f32 %v1322, %v1362
        %v1364 = vpop.f32.mrb[0].mxu0
        %1365 = vdwg.mxu0
        %v1366 = vpack.c.bf16 %v1363, %v1360
        %v1367 = vld [vmem:[#allocation7] sm:$0x1]
        %v1369 = vpack.i.b16 %v1367, %v1367
        %v1371 = vlaneseq
        %v1372 = vshrl.u32 %v1371, 7
        %v1373 = vsub.s32 0, %v1372
        %v1374 = vrot.slane %v1369, %v1373
        %v1375 = vadd.bf16 %v1366, %v1374
        %v1376 = vmax.bf16 %v1375, 0
        %v1377 = vld [vmem:[#allocation8] sm:$0xf]
        %v1378 = vld [vmem:[#allocation8 + $0x4] sm:$0xf]
        %v1379 = vld [vmem:[#allocation8 + $0x8] sm:$0xf]
        %v1380 = vld [vmem:[#allocation8 + $0xc] sm:$0xf]
        %v1381 = vld [vmem:[#allocation8 + $0x10] sm:$0xf]
        %v1382 = vld [vmem:[#allocation8 + $0x14] sm:$0xf]
        %v1383 = vld [vmem:[#allocation8 + $0x18] sm:$0xf]
        %v1384 = vld [vmem:[#allocation8 + $0x1c] sm:$0xf]
        %v1385 = vld [vmem:[#allocation8 + $0x20] sm:$0xf]
        %v1386 = vld [vmem:[#allocation8 + $0x24] sm:$0xf]
        %v1387 = vld [vmem:[#allocation8 + $0x28] sm:$0xf]
        %v1388 = vld [vmem:[#allocation8 + $0x2c] sm:$0xf]
        %v1389 = vld [vmem:[#allocation8 + $0x30] sm:$0xf]
        %v1390 = vld [vmem:[#allocation8 + $0x34] sm:$0xf]
        %v1391 = vld [vmem:[#allocation8 + $0x38] sm:$0xf]
        %v1392 = vld [vmem:[#allocation8 + $0x3c] sm:$0xf]
        %v1409 = vunpack.c.l.b16 %v1377
        %v1410 = vunpack.c.l.b16 %v1378
        %v1411 = vunpack.c.l.b16 %v1379
        %v1412 = vunpack.c.l.b16 %v1380
        %v1413 = vunpack.c.l.b16 %v1381
        %v1414 = vunpack.c.l.b16 %v1382
        %v1415 = vunpack.c.l.b16 %v1383
        %v1416 = vunpack.c.l.b16 %v1384
        %v1417 = vunpack.c.l.b16 %v1385
        %v1418 = vunpack.c.l.b16 %v1386
        %v1419 = vunpack.c.l.b16 %v1387
        %v1420 = vunpack.c.l.b16 %v1388
        %v1421 = vunpack.c.l.b16 %v1389
        %v1422 = vunpack.c.l.b16 %v1390
        %v1423 = vunpack.c.l.b16 %v1391
        %v1424 = vunpack.c.l.b16 %v1392
        %v1425 = vpack.c.b16 %v1410, %v1409
        %v1426 = vpack.c.b16 %v1412, %v1411
        %v1427 = vpack.c.b16 %v1414, %v1413
        %v1428 = vpack.c.b16 %v1416, %v1415
        %v1429 = vpack.c.b16 %v1418, %v1417
        %v1430 = vpack.c.b16 %v1420, %v1419
        %v1431 = vpack.c.b16 %v1422, %v1421
        %v1432 = vpack.c.b16 %v1424, %v1423
        %1441 = vmatprep.subr.bf16.mxu0 0
        %1442 = vmatpush1.bf16.msra.mxu0 %v1425
        %1443 = vmatprep.subr.bf16.mxu0 0
        %1444 = vmatpush1.bf16.msra.mxu0 %v1426
        %1445 = vmatprep.subr.bf16.mxu0 0
        %1446 = vmatpush1.bf16.msra.mxu0 %v1427
        %1447 = vmatprep.subr.bf16.mxu0 0
        %1448 = vmatpush1.bf16.msra.mxu0 %v1428
        %1449 = vmatprep.subr.bf16.mxu0 0
        %1450 = vmatpush1.bf16.msra.mxu0 %v1429
        %1451 = vmatprep.subr.bf16.mxu0 0
        %1452 = vmatpush1.bf16.msra.mxu0 %v1430
        %1453 = vmatprep.subr.bf16.mxu0 0
        %1454 = vmatpush1.bf16.msra.mxu0 %v1431
        %1455 = vmatprep.subr.bf16.mxu0 0
        %1456 = vmatpush1.bf16.msra.mxu0 %v1432
        %1457 = vmatprep.subr.bf16.mxu0 0
        %1458 = vmatpush1.bf16.msra.mxu0 0
        %1459 = vmatprep.subr.bf16.mxu0 0
        %1460 = vmatpush1.bf16.msra.mxu0 0
        %1461 = vmatprep.subr.bf16.mxu0 0
        %1462 = vmatpush1.bf16.msra.mxu0 0
        %1463 = vmatprep.subr.bf16.mxu0 0
        %1464 = vmatpush1.bf16.msra.mxu0 0
        %1465 = vmatprep.subr.bf16.mxu0 0
        %1466 = vmatpush1.bf16.msra.mxu0 0
        %1467 = vmatprep.subr.bf16.mxu0 0
        %1468 = vmatpush1.bf16.msra.mxu0 0
        %1469 = vmatprep.subr.bf16.mxu0 0
        %1470 = vmatpush1.bf16.msra.mxu0 0
        %1471 = vmatprep.subr.bf16.mxu0 0
        %1472 = vmatpush1.bf16.msra.mxu0 0
        %1473 = vmatprep.mubr.bf16.mxu0 0
        %1474 = vmatmul.mubr.bf16.gmra.mrb[0].mxu0 %v1376
        %v1475 = vpop.f32.mrb[0].mxu0
        %v1476 = vadd.f32 0.0, %v1475
        %v1477 = vpop.f32.mrb[0].mxu0
        %v1478 = vpop.f32.mrb[0].mxu0
        %v1479 = vadd.f32 0.0, %v1478
        %v1480 = vpop.f32.mrb[0].mxu0
        %1481 = vdwg.mxu0
        %v1482 = vpack.c.bf16 %v1479, %v1476
        %v1483 = vld [vmem:[#allocation10] sm:$0x1]
        %v1485 = vpack.i.b16 %v1483, %v1483
        %v1487 = vlaneseq
        %v1488 = vshrl.u32 %v1487, 7
        %v1489 = vsub.s32 0, %v1488
        %v1490 = vrot.slane %v1485, %v1489
        %v1491 = vadd.bf16 %v1482, %v1490
        %v1492 = vmax.bf16 %v1491, 0
        %v1493 = vld [vmem:[#allocation11] sm:$0xf]
        %v1494 = vld [vmem:[#allocation11 + $0x4] sm:$0xf]
        %v1495 = vld [vmem:[#allocation11 + $0x8] sm:$0xf]
        %v1496 = vld [vmem:[#allocation11 + $0xc] sm:$0xf]
        %v1497 = vld [vmem:[#allocation11 + $0x10] sm:$0xf]
        %v1498 = vld [vmem:[#allocation11 + $0x14] sm:$0xf]
        %v1499 = vld [vmem:[#allocation11 + $0x18] sm:$0xf]
        %v1500 = vld [vmem:[#allocation11 + $0x1c] sm:$0xf]
        %v1509 = vunpack.c.l.b16 %v1493
        %v1510 = vunpack.c.l.b16 %v1494
        %v1511 = vunpack.c.l.b16 %v1495
        %v1512 = vunpack.c.l.b16 %v1496
        %v1513 = vunpack.c.l.b16 %v1497
        %v1514 = vunpack.c.l.b16 %v1498
        %v1515 = vunpack.c.l.b16 %v1499
        %v1516 = vunpack.c.l.b16 %v1500
        %v1517 = vpack.c.b16 %v1510, %v1509
        %v1518 = vpack.c.b16 %v1512, %v1511
        %v1519 = vpack.c.b16 %v1514, %v1513
        %v1520 = vpack.c.b16 %v1516, %v1515
        %vm1525 = vcmask 523264
        %v1527 = vsel %vm1525, %v1492, 0
        %1529 = vmatprep.subr.bf16.mxu0 0
        %1530 = vmatpush1.bf16.msra.mxu0 %v1517
        %1531 = vmatprep.subr.bf16.mxu0 0
        %1532 = vmatpush1.bf16.msra.mxu0 %v1518
        %1533 = vmatprep.subr.bf16.mxu0 0
        %1534 = vmatpush1.bf16.msra.mxu0 %v1519
        %1535 = vmatprep.subr.bf16.mxu0 0
        %1536 = vmatpush1.bf16.msra.mxu0 %v1520
        %1537 = vmatprep.subr.bf16.mxu0 0
        %1538 = vmatpush1.bf16.msra.mxu0 0
        %1539 = vmatprep.subr.bf16.mxu0 0
        %1540 = vmatpush1.bf16.msra.mxu0 0
        %1541 = vmatprep.subr.bf16.mxu0 0
        %1542 = vmatpush1.bf16.msra.mxu0 0
        %1543 = vmatprep.subr.bf16.mxu0 0
        %1544 = vmatpush1.bf16.msra.mxu0 0
        %1545 = vmatprep.subr.bf16.mxu0 0
        %1546 = vmatpush1.bf16.msra.mxu0 0
        %1547 = vmatprep.subr.bf16.mxu0 0
        %1548 = vmatpush1.bf16.msra.mxu0 0
        %1549 = vmatprep.subr.bf16.mxu0 0
        %1550 = vmatpush1.bf16.msra.mxu0 0
        %1551 = vmatprep.subr.bf16.mxu0 0
        %1552 = vmatpush1.bf16.msra.mxu0 0
        %1553 = vmatprep.subr.bf16.mxu0 0
        %1554 = vmatpush1.bf16.msra.mxu0 0
        %1555 = vmatprep.subr.bf16.mxu0 0
        %1556 = vmatpush1.bf16.msra.mxu0 0
        %1557 = vmatprep.subr.bf16.mxu0 0
        %1558 = vmatpush1.bf16.msra.mxu0 0
        %1559 = vmatprep.subr.bf16.mxu0 0
        %1560 = vmatpush1.bf16.msra.mxu0 0
        %1561 = vmatprep.mubr.bf16.mxu0 0
        %1562 = vmatmul.mubr.bf16.gmra.mrb[0].mxu0 %v1527
        %v1563 = vpop.f32.mrb[0].mxu0
        %v1564 = vadd.f32 0.0, %v1563
        %v1565 = vpop.f32.mrb[0].mxu0
        %v1566 = vpop.f32.mrb[0].mxu0
        %v1567 = vadd.f32 0.0, %v1566
        %v1568 = vpop.f32.mrb[0].mxu0
        %1569 = vdwg.mxu0
        %v1570 = vpack.c.bf16 %v1567, %v1564
        %v1571 = vld [vmem:[#allocation13] sm:$0x1]
        %v1573 = vpack.i.b16 %v1571, %v1571
        %v1575 = vlaneseq
        %v1576 = vshrl.u32 %v1575, 7
        %v1577 = vsub.s32 0, %v1576
        %v1578 = vrot.slane %v1573, %v1577
        %v1579 = vadd.bf16 %v1570, %v1578
        %v1580 = vmax.bf16 %v1579, 0
        %v1581 = vld [vmem:[#allocation14] sm:$0xf]
        %v1582 = vld [vmem:[#allocation14 + $0x4] sm:$0x3]
        %v1585 = vunpack.c.l.b16 %v1581
        %v1586 = vunpack.c.l.b16 %v1582
        %v1587 = vpack.c.b16 %v1586, %v1585
        %vm1588 = vcmask 97280
        %v1590 = vsel %vm1588, %v1580, 0
        %vm1592 = vcmask 1045504
        %v1594 = vsel %vm1592, %v1587, 0
        %1596 = vmatprep.subr.bf16.mxu0 0
        %1597 = vmatpush1.bf16.msra.mxu0 %v1594
        %1598 = vmatprep.subr.bf16.mxu0 0
        %1599 = vmatpush1.bf16.msra.mxu0 0
        %1600 = vmatprep.subr.bf16.mxu0 0
        %1601 = vmatpush1.bf16.msra.mxu0 0
        %1602 = vmatprep.subr.bf16.mxu0 0
        %1603 = vmatpush1.bf16.msra.mxu0 0
        %1604 = vmatprep.subr.bf16.mxu0 0
        %1605 = vmatpush1.bf16.msra.mxu0 0
        %1606 = vmatprep.subr.bf16.mxu0 0
        %1607 = vmatpush1.bf16.msra.mxu0 0
        %1608 = vmatprep.subr.bf16.mxu0 0
        %1609 = vmatpush1.bf16.msra.mxu0 0
        %1610 = vmatprep.subr.bf16.mxu0 0
        %1611 = vmatpush1.bf16.msra.mxu0 0
        %1612 = vmatprep.subr.bf16.mxu0 0
        %1613 = vmatpush1.bf16.msra.mxu0 0
        %1614 = vmatprep.subr.bf16.mxu0 0
        %1615 = vmatpush1.bf16.msra.mxu0 0
        %1616 = vmatprep.subr.bf16.mxu0 0
        %1617 = vmatpush1.bf16.msra.mxu0 0
        %1618 = vmatprep.subr.bf16.mxu0 0
        %1619 = vmatpush1.bf16.msra.mxu0 0
        %1620 = vmatprep.subr.bf16.mxu0 0
        %1621 = vmatpush1.bf16.msra.mxu0 0
        %1622 = vmatprep.subr.bf16.mxu0 0
        %1623 = vmatpush1.bf16.msra.mxu0 0
        %1624 = vmatprep.subr.bf16.mxu0 0
        %1625 = vmatpush1.bf16.msra.mxu0 0
        %1626 = vmatprep.subr.bf16.mxu0 0
        %1627 = vmatpush1.bf16.msra.mxu0 0
        %1628 = vmatprep.mubr.bf16.mxu0 0
        %1629 = vmatmul.mubr.bf16.gmra.mrb[0].mxu0 %v1590
        %v1630 = vpop.f32.mrb[0].mxu0
        %v1631 = vadd.f32 0.0, %v1630
        %v1632 = vpop.f32.mrb[0].mxu0
        %v1633 = vpop.f32.mrb[0].mxu0
        %v1634 = vadd.f32 0.0, %v1633
        %v1635 = vpop.f32.mrb[0].mxu0
        %1636 = vdwg.mxu0
        %v1637 = vpack.c.bf16 %v1634, %v1631
        %v1638 = vld [vmem:[#allocation16] sm:$0x1]
        %v1640 = vpack.i.b16 %v1638, %v1638
        %v1642 = vlaneseq
        %v1643 = vshrl.u32 %v1642, 7
        %v1644 = vsub.s32 0, %v1643
        %v1645 = vrot.slane %v1640, %v1644
        %v1646 = vadd.bf16 %v1637, %v1645
        %v1647 = vld [vmem:[#allocation17] sm:$0x3]
        %vm1648 = vcmask 23552
        %v1650 = vsel %vm1648, %v1646, 0
        %vm1652 = vcmask 1040384
        %vm1653 = vcmask 1041408
        %v1654 = vsel %vm1652, 4294967295, 65535
        %v1655 = vsel %vm1653, %v1654, 0
        %v1657 = vand.u32 %v1647, %v1655
        %1659 = vmatprep.subr.bf16.mxu0 0
        %1660 = vmatpush1.bf16.msra.mxu0 %v1657
        %1661 = vmatprep.subr.bf16.mxu0 0
        %1662 = vmatpush1.bf16.msra.mxu0 0
        %1663 = vmatprep.subr.bf16.mxu0 0
        %1664 = vmatpush1.bf16.msra.mxu0 0
        %1665 = vmatprep.subr.bf16.mxu0 0
        %1666 = vmatpush1.bf16.msra.mxu0 0
        %1667 = vmatprep.subr.bf16.mxu0 0
        %1668 = vmatpush1.bf16.msra.mxu0 0
        %1669 = vmatprep.subr.bf16.mxu0 0
        %1670 = vmatpush1.bf16.msra.mxu0 0
        %1671 = vmatprep.subr.bf16.mxu0 0
        %1672 = vmatpush1.bf16.msra.mxu0 0
        %1673 = vmatprep.subr.bf16.mxu0 0
        %1674 = vmatpush1.bf16.msra.mxu0 0
        %1675 = vmatprep.subr.bf16.mxu0 0
        %1676 = vmatpush1.bf16.msra.mxu0 0
        %1677 = vmatprep.subr.bf16.mxu0 0
        %1678 = vmatpush1.bf16.msra.mxu0 0
        %1679 = vmatprep.subr.bf16.mxu0 0
        %1680 = vmatpush1.bf16.msra.mxu0 0
        %1681 = vmatprep.subr.bf16.mxu0 0
        %1682 = vmatpush1.bf16.msra.mxu0 0
        %1683 = vmatprep.subr.bf16.mxu0 0
        %1684 = vmatpush1.bf16.msra.mxu0 0
        %1685 = vmatprep.subr.bf16.mxu0 0
        %1686 = vmatpush1.bf16.msra.mxu0 0
        %1687 = vmatprep.subr.bf16.mxu0 0
        %1688 = vmatpush1.bf16.msra.mxu0 0
        %1689 = vmatprep.subr.bf16.mxu0 0
        %1690 = vmatpush1.bf16.msra.mxu0 0
        %1691 = vmatprep.mubr.bf16.mxu0 0
        %1692 = vmatmul.mubr.bf16.gmra.mrb[0].mxu0 %v1650
        %v1693 = vpop.f32.mrb[0].mxu0
        %v1694 = vadd.f32 0.0, %v1693
        %v1695 = vpop.f32.mrb[0].mxu0
        %v1696 = vpop.f32.mrb[0].mxu0
        %v1697 = vadd.f32 0.0, %v1696
        %v1698 = vpop.f32.mrb[0].mxu0
        %1699 = vdwg.mxu0
        %v1700 = vpack.c.bf16 %v1697, %v1694
        %v1701 = vld [vmem:[#allocation19] sm:$0x1]
        %v1703 = vpack.i.b16 %v1701, %v1701
        %v1705 = vlaneseq
        %v1706 = vshrl.u32 %v1705, 7
        %v1707 = vsub.s32 0, %v1706
        %v1708 = vrot.slane %v1703, %v1707
        %v1709 = vadd.bf16 %v1700, %v1708
        %v1710 = vmax.bf16 %v1709, 0
        %v1711 = vld [vmem:[#allocation20] sm:$0xf]
        %v1712 = vld [vmem:[#allocation20 + $0x4] sm:$0x3]
        %v1715 = vunpack.c.l.b16 %v1711
        %v1716 = vunpack.c.l.b16 %v1712
        %v1717 = vpack.c.b16 %v1716, %v1715
        %v1719 = vsel %vm1588, %v1710, 0
        %v1722 = vsel %vm1592, %v1717, 0
        %1724 = vmatprep.subr.bf16.mxu0 0
        %1725 = vmatpush1.bf16.msra.mxu0 %v1722
        %1726 = vmatprep.subr.bf16.mxu0 0
        %1727 = vmatpush1.bf16.msra.mxu0 0
        %1728 = vmatprep.subr.bf16.mxu0 0
        %1729 = vmatpush1.bf16.msra.mxu0 0
        %1730 = vmatprep.subr.bf16.mxu0 0
        %1731 = vmatpush1.bf16.msra.mxu0 0
        %1732 = vmatprep.subr.bf16.mxu0 0
        %1733 = vmatpush1.bf16.msra.mxu0 0
        %1734 = vmatprep.subr.bf16.mxu0 0
        %1735 = vmatpush1.bf16.msra.mxu0 0
        %1736 = vmatprep.subr.bf16.mxu0 0
        %1737 = vmatpush1.bf16.msra.mxu0 0
        %1738 = vmatprep.subr.bf16.mxu0 0
        %1739 = vmatpush1.bf16.msra.mxu0 0
        %1740 = vmatprep.subr.bf16.mxu0 0
        %1741 = vmatpush1.bf16.msra.mxu0 0
        %1742 = vmatprep.subr.bf16.mxu0 0
        %1743 = vmatpush1.bf16.msra.mxu0 0
        %1744 = vmatprep.subr.bf16.mxu0 0
        %1745 = vmatpush1.bf16.msra.mxu0 0
        %1746 = vmatprep.subr.bf16.mxu0 0
        %1747 = vmatpush1.bf16.msra.mxu0 0
        %1748 = vmatprep.subr.bf16.mxu0 0
        %1749 = vmatpush1.bf16.msra.mxu0 0
        %1750 = vmatprep.subr.bf16.mxu0 0
        %1751 = vmatpush1.bf16.msra.mxu0 0
        %1752 = vmatprep.subr.bf16.mxu0 0
        %1753 = vmatpush1.bf16.msra.mxu0 0
        %1754 = vmatprep.subr.bf16.mxu0 0
        %1755 = vmatpush1.bf16.msra.mxu0 0
        %1756 = vmatprep.mubr.bf16.mxu0 0
        %1757 = vmatmul.mubr.bf16.gmra.mrb[0].mxu0 %v1719
        %v1758 = vpop.f32.mrb[0].mxu0
        %v1759 = vadd.f32 0.0, %v1758
        %v1760 = vpop.f32.mrb[0].mxu0
        %v1761 = vpop.f32.mrb[0].mxu0
        %v1762 = vadd.f32 0.0, %v1761
        %v1763 = vpop.f32.mrb[0].mxu0
        %1764 = vdwg.mxu0
        %v1765 = vpack.c.bf16 %v1762, %v1759
        %v1766 = vld [vmem:[#allocation22] sm:$0x1]
        %v1768 = vpack.i.b16 %v1766, %v1766
        %v1770 = vlaneseq
        %v1771 = vshrl.u32 %v1770, 7
        %v1772 = vsub.s32 0, %v1771
        %v1773 = vrot.slane %v1768, %v1772
        %v1774 = vadd.bf16 %v1765, %v1773
        %v1775 = vmax.bf16 %v1774, 0
        %v1776 = vld [vmem:[#allocation23] sm:$0xf]
        %v1777 = vld [vmem:[#allocation23 + $0x4] sm:$0xf]
        %v1778 = vld [vmem:[#allocation23 + $0x8] sm:$0xf]
        %v1779 = vld [vmem:[#allocation23 + $0xc] sm:$0xf]
        %v1780 = vld [vmem:[#allocation23 + $0x10] sm:$0xf]
        %v1781 = vld [vmem:[#allocation23 + $0x14] sm:$0xf]
        %v1782 = vld [vmem:[#allocation23 + $0x18] sm:$0xf]
        %v1783 = vld [vmem:[#allocation23 + $0x1c] sm:$0xf]
        %v1792 = vunpack.c.l.b16 %v1776
        %v1793 = vunpack.c.l.b16 %v1777
        %v1794 = vunpack.c.l.b16 %v1778
        %v1795 = vunpack.c.l.b16 %v1779
        %v1796 = vunpack.c.l.b16 %v1780
        %v1797 = vunpack.c.l.b16 %v1781
        %v1798 = vunpack.c.l.b16 %v1782
        %v1799 = vunpack.c.l.b16 %v1783
        %v1800 = vpack.c.b16 %v1793, %v1792
        %v1801 = vpack.c.b16 %v1795, %v1794
        %v1802 = vpack.c.b16 %v1797, %v1796
        %v1803 = vpack.c.b16 %v1799, %v1798
        %v1809 = vsel %vm1525, %v1775, 0
        %1811 = vmatprep.subr.bf16.mxu0 0
        %1812 = vmatpush1.bf16.msra.mxu0 %v1800
        %1813 = vmatprep.subr.bf16.mxu0 0
        %1814 = vmatpush1.bf16.msra.mxu0 %v1801
        %1815 = vmatprep.subr.bf16.mxu0 0
        %1816 = vmatpush1.bf16.msra.mxu0 %v1802
        %1817 = vmatprep.subr.bf16.mxu0 0
        %1818 = vmatpush1.bf16.msra.mxu0 %v1803
        %1819 = vmatprep.subr.bf16.mxu0 0
        %1820 = vmatpush1.bf16.msra.mxu0 0
        %1821 = vmatprep.subr.bf16.mxu0 0
        %1822 = vmatpush1.bf16.msra.mxu0 0
        %1823 = vmatprep.subr.bf16.mxu0 0
        %1824 = vmatpush1.bf16.msra.mxu0 0
        %1825 = vmatprep.subr.bf16.mxu0 0
        %1826 = vmatpush1.bf16.msra.mxu0 0
        %1827 = vmatprep.subr.bf16.mxu0 0
        %1828 = vmatpush1.bf16.msra.mxu0 0
        %1829 = vmatprep.subr.bf16.mxu0 0
        %1830 = vmatpush1.bf16.msra.mxu0 0
        %1831 = vmatprep.subr.bf16.mxu0 0
        %1832 = vmatpush1.bf16.msra.mxu0 0
        %1833 = vmatprep.subr.bf16.mxu0 0
        %1834 = vmatpush1.bf16.msra.mxu0 0
        %1835 = vmatprep.subr.bf16.mxu0 0
        %1836 = vmatpush1.bf16.msra.mxu0 0
        %1837 = vmatprep.subr.bf16.mxu0 0
        %1838 = vmatpush1.bf16.msra.mxu0 0
        %1839 = vmatprep.subr.bf16.mxu0 0
        %1840 = vmatpush1.bf16.msra.mxu0 0
        %1841 = vmatprep.subr.bf16.mxu0 0
        %1842 = vmatpush1.bf16.msra.mxu0 0
        %1843 = vmatprep.mubr.bf16.mxu0 0
        %1844 = vmatmul.mubr.bf16.gmra.mrb[0].mxu0 %v1809
        %v1845 = vpop.f32.mrb[0].mxu0
        %v1846 = vadd.f32 0.0, %v1845
        %v1847 = vpop.f32.mrb[0].mxu0
        %v1848 = vpop.f32.mrb[0].mxu0
        %v1849 = vadd.f32 0.0, %v1848
        %v1850 = vpop.f32.mrb[0].mxu0
        %1851 = vdwg.mxu0
        %v1852 = vpack.c.bf16 %v1849, %v1846
        %v1853 = vld [vmem:[#allocation25] sm:$0x1]
        %v1855 = vpack.i.b16 %v1853, %v1853
        %v1857 = vlaneseq
        %v1858 = vshrl.u32 %v1857, 7
        %v1859 = vsub.s32 0, %v1858
        %v1860 = vrot.slane %v1855, %v1859
        %v1861 = vadd.bf16 %v1852, %v1860
        %v1862 = vmax.bf16 %v1861, 0
        %v1863 = vld [vmem:[#allocation26] sm:$0xff]
        %v1864 = vld [vmem:[#allocation26 + $0x8] sm:$0xff]
        %v1865 = vld [vmem:[#allocation26 + $0x10] sm:$0xff]
        %v1866 = vld [vmem:[#allocation26 + $0x18] sm:$0xf]
        %v1867 = vld [vmem:[#allocation26 + $0x1c] sm:$0xff]
        %v1868 = vld [vmem:[#allocation26 + $0x24] sm:$0xff]
        %v1869 = vld [vmem:[#allocation26 + $0x2c] sm:$0xff]
        %v1870 = vld [vmem:[#allocation26 + $0x34] sm:$0xf]
        %v1871 = vld [vmem:[#allocation26 + $0x38] sm:$0xff]
        %v1872 = vld [vmem:[#allocation26 + $0x40] sm:$0xff]
        %v1873 = vld [vmem:[#allocation26 + $0x48] sm:$0xff]
        %v1874 = vld [vmem:[#allocation26 + $0x50] sm:$0xf]
        %v1875 = vld [vmem:[#allocation26 + $0x54] sm:$0xff]
        %v1876 = vld [vmem:[#allocation26 + $0x5c] sm:$0xff]
        %v1877 = vld [vmem:[#allocation26 + $0x64] sm:$0xff]
        %v1878 = vld [vmem:[#allocation26 + $0x6c] sm:$0xf]
        %v1879 = vld [vmem:[#allocation26 + $0x70] sm:$0xff]
        %v1880 = vld [vmem:[#allocation26 + $0x78] sm:$0xff]
        %v1881 = vld [vmem:[#allocation26 + $0x80] sm:$0xff]
        %v1882 = vld [vmem:[#allocation26 + $0x88] sm:$0xf]
        %v1883 = vld [vmem:[#allocation26 + $0x8c] sm:$0xff]
        %v1884 = vld [vmem:[#allocation26 + $0x94] sm:$0xff]
        %v1885 = vld [vmem:[#allocation26 + $0x9c] sm:$0xff]
        %v1886 = vld [vmem:[#allocation26 + $0xa4] sm:$0xf]
        %v1887 = vld [vmem:[#allocation26 + $0xa8] sm:$0xff]
        %v1888 = vld [vmem:[#allocation26 + $0xb0] sm:$0xff]
        %v1889 = vld [vmem:[#allocation26 + $0xb8] sm:$0xff]
        %v1890 = vld [vmem:[#allocation26 + $0xc0] sm:$0xf]
        %v1891 = vld [vmem:[#allocation26 + $0xc4] sm:$0xff]
        %v1892 = vld [vmem:[#allocation26 + $0xcc] sm:$0xff]
        %v1893 = vld [vmem:[#allocation26 + $0xd4] sm:$0xff]
        %v1894 = vld [vmem:[#allocation26 + $0xdc] sm:$0xf]
        %v1895 = vld [vmem:[#allocation26 + $0xe0] sm:$0xff]
        %v1896 = vld [vmem:[#allocation26 + $0xe8] sm:$0xff]
        %v1897 = vld [vmem:[#allocation26 + $0xf0] sm:$0xff]
        %v1898 = vld [vmem:[#allocation26 + $0xf8] sm:$0xf]
        %v1899 = vld [vmem:[#allocation26 + $0xfc] sm:$0xff]
        %v1900 = vld [vmem:[#allocation26 + $0x104] sm:$0xff]
        %v1901 = vld [vmem:[#allocation26 + $0x10c] sm:$0xff]
        %v1902 = vld [vmem:[#allocation26 + $0x114] sm:$0xf]
        %v1903 = vld [vmem:[#allocation26 + $0x118] sm:$0xff]
        %v1904 = vld [vmem:[#allocation26 + $0x120] sm:$0xff]
        %v1905 = vld [vmem:[#allocation26 + $0x128] sm:$0xff]
        %v1906 = vld [vmem:[#allocation26 + $0x130] sm:$0xf]
        %v1907 = vld [vmem:[#allocation26 + $0x134] sm:$0xff]
        %v1908 = vld [vmem:[#allocation26 + $0x13c] sm:$0xff]
        %v1909 = vld [vmem:[#allocation26 + $0x144] sm:$0xff]
        %v1910 = vld [vmem:[#allocation26 + $0x14c] sm:$0xf]
        %v1911 = vld [vmem:[#allocation26 + $0x150] sm:$0xff]
        %v1912 = vld [vmem:[#allocation26 + $0x158] sm:$0xff]
        %v1913 = vld [vmem:[#allocation26 + $0x160] sm:$0xff]
        %v1914 = vld [vmem:[#allocation26 + $0x168] sm:$0xf]
        %v1915 = vld [vmem:[#allocation26 + $0x16c] sm:$0xff]
        %v1916 = vld [vmem:[#allocation26 + $0x174] sm:$0xff]
        %v1917 = vld [vmem:[#allocation26 + $0x17c] sm:$0xff]
        %v1918 = vld [vmem:[#allocation26 + $0x184] sm:$0xf]
        %v1919 = vld [vmem:[#allocation26 + $0x188] sm:$0xff]
        %v1920 = vld [vmem:[#allocation26 + $0x190] sm:$0xff]
        %v1921 = vld [vmem:[#allocation26 + $0x198] sm:$0xff]
        %v1922 = vld [vmem:[#allocation26 + $0x1a0] sm:$0xf]
        %v1923 = vld [vmem:[#allocation26 + $0x1a4] sm:$0xff]
        %v1924 = vld [vmem:[#allocation26 + $0x1ac] sm:$0xff]
        %v1925 = vld [vmem:[#allocation26 + $0x1b4] sm:$0xff]
        %v1926 = vld [vmem:[#allocation26 + $0x1bc] sm:$0xf]
        %v1991 = vunpack.c.l.b16 %v1863
        %v1992 = vunpack.c.h.b16 %v1863
        %v1993 = vunpack.c.l.b16 %v1864
        %v1994 = vunpack.c.h.b16 %v1864
        %v1995 = vunpack.c.l.b16 %v1865
        %v1996 = vunpack.c.h.b16 %v1865
        %v1997 = vunpack.c.l.b16 %v1866
        %v1998 = vunpack.c.l.b16 %v1867
        %v1999 = vunpack.c.h.b16 %v1867
        %v2000 = vunpack.c.l.b16 %v1868
        %v2001 = vunpack.c.h.b16 %v1868
        %v2002 = vunpack.c.l.b16 %v1869
        %v2003 = vunpack.c.h.b16 %v1869
        %v2004 = vunpack.c.l.b16 %v1870
        %v2005 = vunpack.c.l.b16 %v1871
        %v2006 = vunpack.c.h.b16 %v1871
        %v2007 = vunpack.c.l.b16 %v1872
        %v2008 = vunpack.c.h.b16 %v1872
        %v2009 = vunpack.c.l.b16 %v1873
        %v2010 = vunpack.c.h.b16 %v1873
        %v2011 = vunpack.c.l.b16 %v1874
        %v2012 = vunpack.c.l.b16 %v1875
        %v2013 = vunpack.c.h.b16 %v1875
        %v2014 = vunpack.c.l.b16 %v1876
        %v2015 = vunpack.c.h.b16 %v1876
        %v2016 = vunpack.c.l.b16 %v1877
        %v2017 = vunpack.c.h.b16 %v1877
        %v2018 = vunpack.c.l.b16 %v1878
        %v2019 = vunpack.c.l.b16 %v1879
        %v2020 = vunpack.c.h.b16 %v1879
        %v2021 = vunpack.c.l.b16 %v1880
        %v2022 = vunpack.c.h.b16 %v1880
        %v2023 = vunpack.c.l.b16 %v1881
        %v2024 = vunpack.c.h.b16 %v1881
        %v2025 = vunpack.c.l.b16 %v1882
        %v2026 = vunpack.c.l.b16 %v1883
        %v2027 = vunpack.c.h.b16 %v1883
        %v2028 = vunpack.c.l.b16 %v1884
        %v2029 = vunpack.c.h.b16 %v1884
        %v2030 = vunpack.c.l.b16 %v1885
        %v2031 = vunpack.c.h.b16 %v1885
        %v2032 = vunpack.c.l.b16 %v1886
        %v2033 = vunpack.c.l.b16 %v1887
        %v2034 = vunpack.c.h.b16 %v1887
        %v2035 = vunpack.c.l.b16 %v1888
        %v2036 = vunpack.c.h.b16 %v1888
        %v2037 = vunpack.c.l.b16 %v1889
        %v2038 = vunpack.c.h.b16 %v1889
        %v2039 = vunpack.c.l.b16 %v1890
        %v2040 = vunpack.c.l.b16 %v1891
        %v2041 = vunpack.c.h.b16 %v1891
        %v2042 = vunpack.c.l.b16 %v1892
        %v2043 = vunpack.c.h.b16 %v1892
        %v2044 = vunpack.c.l.b16 %v1893
        %v2045 = vunpack.c.h.b16 %v1893
        %v2046 = vunpack.c.l.b16 %v1894
        %v2047 = vunpack.c.l.b16 %v1895
        %v2048 = vunpack.c.h.b16 %v1895
        %v2049 = vunpack.c.l.b16 %v1896
        %v2050 = vunpack.c.h.b16 %v1896
        %v2051 = vunpack.c.l.b16 %v1897
        %v2052 = vunpack.c.h.b16 %v1897
        %v2053 = vunpack.c.l.b16 %v1898
        %v2054 = vunpack.c.l.b16 %v1899
        %v2055 = vunpack.c.h.b16 %v1899
        %v2056 = vunpack.c.l.b16 %v1900
        %v2057 = vunpack.c.h.b16 %v1900
        %v2058 = vunpack.c.l.b16 %v1901
        %v2059 = vunpack.c.h.b16 %v1901
        %v2060 = vunpack.c.l.b16 %v1902
        %v2061 = vunpack.c.l.b16 %v1903
        %v2062 = vunpack.c.h.b16 %v1903
        %v2063 = vunpack.c.l.b16 %v1904
        %v2064 = vunpack.c.h.b16 %v1904
        %v2065 = vunpack.c.l.b16 %v1905
        %v2066 = vunpack.c.h.b16 %v1905
        %v2067 = vunpack.c.l.b16 %v1906
        %v2068 = vunpack.c.l.b16 %v1907
        %v2069 = vunpack.c.h.b16 %v1907
        %v2070 = vunpack.c.l.b16 %v1908
        %v2071 = vunpack.c.h.b16 %v1908
        %v2072 = vunpack.c.l.b16 %v1909
        %v2073 = vunpack.c.h.b16 %v1909
        %v2074 = vunpack.c.l.b16 %v1910
        %v2075 = vunpack.c.l.b16 %v1911
        %v2076 = vunpack.c.h.b16 %v1911
        %v2077 = vunpack.c.l.b16 %v1912
        %v2078 = vunpack.c.h.b16 %v1912
        %v2079 = vunpack.c.l.b16 %v1913
        %v2080 = vunpack.c.h.b16 %v1913
        %v2081 = vunpack.c.l.b16 %v1914
        %v2082 = vunpack.c.l.b16 %v1915
        %v2083 = vunpack.c.h.b16 %v1915
        %v2084 = vunpack.c.l.b16 %v1916
        %v2085 = vunpack.c.h.b16 %v1916
        %v2086 = vunpack.c.l.b16 %v1917
        %v2087 = vunpack.c.h.b16 %v1917
        %v2088 = vunpack.c.l.b16 %v1918
        %v2089 = vunpack.c.l.b16 %v1919
        %v2090 = vunpack.c.h.b16 %v1919
        %v2091 = vunpack.c.l.b16 %v1920
        %v2092 = vunpack.c.h.b16 %v1920
        %v2093 = vunpack.c.l.b16 %v1921
        %v2094 = vunpack.c.h.b16 %v1921
        %v2095 = vunpack.c.l.b16 %v1922
        %v2096 = vunpack.c.l.b16 %v1923
        %v2097 = vunpack.c.h.b16 %v1923
        %v2098 = vunpack.c.l.b16 %v1924
        %v2099 = vunpack.c.h.b16 %v1924
        %v2100 = vunpack.c.l.b16 %v1925
        %v2101 = vunpack.c.h.b16 %v1925
        %v2102 = vunpack.c.l.b16 %v1926
        %v2103 = vpack.c.b16 %v1998, %v1991
        %v2104 = vpack.c.b16 %v1999, %v1992
        %v2105 = vpack.c.b16 %v2000, %v1993
        %v2106 = vpack.c.b16 %v2001, %v1994
        %v2107 = vpack.c.b16 %v2002, %v1995
        %v2108 = vpack.c.b16 %v2003, %v1996
        %v2109 = vpack.c.b16 %v2004, %v1997
        %v2110 = vpack.c.b16 %v2012, %v2005
        %v2111 = vpack.c.b16 %v2013, %v2006
        %v2112 = vpack.c.b16 %v2014, %v2007
        %v2113 = vpack.c.b16 %v2015, %v2008
        %v2114 = vpack.c.b16 %v2016, %v2009
        %v2115 = vpack.c.b16 %v2017, %v2010
        %v2116 = vpack.c.b16 %v2018, %v2011
        %v2117 = vpack.c.b16 %v2026, %v2019
        %v2118 = vpack.c.b16 %v2027, %v2020
        %v2119 = vpack.c.b16 %v2028, %v2021
        %v2120 = vpack.c.b16 %v2029, %v2022
        %v2121 = vpack.c.b16 %v2030, %v2023
        %v2122 = vpack.c.b16 %v2031, %v2024
        %v2123 = vpack.c.b16 %v2032, %v2025
        %v2124 = vpack.c.b16 %v2040, %v2033
        %v2125 = vpack.c.b16 %v2041, %v2034
        %v2126 = vpack.c.b16 %v2042, %v2035
        %v2127 = vpack.c.b16 %v2043, %v2036
        %v2128 = vpack.c.b16 %v2044, %v2037
        %v2129 = vpack.c.b16 %v2045, %v2038
        %v2130 = vpack.c.b16 %v2046, %v2039
        %v2131 = vpack.c.b16 %v2054, %v2047
        %v2132 = vpack.c.b16 %v2055, %v2048
        %v2133 = vpack.c.b16 %v2056, %v2049
        %v2134 = vpack.c.b16 %v2057, %v2050
        %v2135 = vpack.c.b16 %v2058, %v2051
        %v2136 = vpack.c.b16 %v2059, %v2052
        %v2137 = vpack.c.b16 %v2060, %v2053
        %v2138 = vpack.c.b16 %v2068, %v2061
        %v2139 = vpack.c.b16 %v2069, %v2062
        %v2140 = vpack.c.b16 %v2070, %v2063
        %v2141 = vpack.c.b16 %v2071, %v2064
        %v2142 = vpack.c.b16 %v2072, %v2065
        %v2143 = vpack.c.b16 %v2073, %v2066
        %v2144 = vpack.c.b16 %v2074, %v2067
        %v2145 = vpack.c.b16 %v2082, %v2075
        %v2146 = vpack.c.b16 %v2083, %v2076
        %v2147 = vpack.c.b16 %v2084, %v2077
        %v2148 = vpack.c.b16 %v2085, %v2078
        %v2149 = vpack.c.b16 %v2086, %v2079
        %v2150 = vpack.c.b16 %v2087, %v2080
        %v2151 = vpack.c.b16 %v2088, %v2081
        %v2152 = vpack.c.b16 %v2096, %v2089
        %v2153 = vpack.c.b16 %v2097, %v2090
        %v2154 = vpack.c.b16 %v2098, %v2091
        %v2155 = vpack.c.b16 %v2099, %v2092
        %v2156 = vpack.c.b16 %v2100, %v2093
        %v2157 = vpack.c.b16 %v2101, %v2094
        %v2158 = vpack.c.b16 %v2102, %v2095
        %2215 = vmatprep.subr.bf16.mxu0 %v2104
        %2216 = vmatpush1.bf16.msra.mxu0 %v2103
        %2217 = vmatprep.subr.bf16.mxu0 %v2111
        %2218 = vmatpush1.bf16.msra.mxu0 %v2110
        %2219 = vmatprep.subr.bf16.mxu0 %v2118
        %2220 = vmatpush1.bf16.msra.mxu0 %v2117
        %2221 = vmatprep.subr.bf16.mxu0 %v2125
        %2222 = vmatpush1.bf16.msra.mxu0 %v2124
        %2223 = vmatprep.subr.bf16.mxu0 %v2132
        %2224 = vmatpush1.bf16.msra.mxu0 %v2131
        %2225 = vmatprep.subr.bf16.mxu0 %v2139
        %2226 = vmatpush1.bf16.msra.mxu0 %v2138
        %2227 = vmatprep.subr.bf16.mxu0 %v2146
        %2228 = vmatpush1.bf16.msra.mxu0 %v2145
        %2229 = vmatprep.subr.bf16.mxu0 %v2153
        %2230 = vmatpush1.bf16.msra.mxu0 %v2152
        %2231 = vmatprep.subr.bf16.mxu0 0
        %2232 = vmatpush1.bf16.msra.mxu0 0
        %2233 = vmatprep.subr.bf16.mxu0 0
        %2234 = vmatpush1.bf16.msra.mxu0 0
        %2235 = vmatprep.subr.bf16.mxu0 0
        %2236 = vmatpush1.bf16.msra.mxu0 0
        %2237 = vmatprep.subr.bf16.mxu0 0
        %2238 = vmatpush1.bf16.msra.mxu0 0
        %2239 = vmatprep.subr.bf16.mxu0 0
        %2240 = vmatpush1.bf16.msra.mxu0 0
        %2241 = vmatprep.subr.bf16.mxu0 0
        %2242 = vmatpush1.bf16.msra.mxu0 0
        %2243 = vmatprep.subr.bf16.mxu0 0
        %2244 = vmatpush1.bf16.msra.mxu0 0
        %2245 = vmatprep.subr.bf16.mxu0 0
        %2246 = vmatpush1.bf16.msra.mxu0 0
        %2247 = vmatprep.mubr.bf16.mxu0 0
        %2248 = vmatmul.mubr.bf16.gmra.mrb[0].mxu0 %v1862
        %v2249 = vpop.f32.mrb[0].mxu0
        %v2250 = vadd.f32 0.0, %v2249
        %v2251 = vpop.f32.mrb[0].mxu0
        %v2252 = vadd.f32 0.0, %v2251
        %v2253 = vpop.f32.mrb[0].mxu0
        %v2254 = vadd.f32 0.0, %v2253
        %v2255 = vpop.f32.mrb[0].mxu0
        %v2256 = vadd.f32 0.0, %v2255
        %2257 = vdwg.mxu0
        %2258 = vmatprep.subr.bf16.mxu0 %v2106
        %2259 = vmatpush1.bf16.msra.mxu0 %v2105
        %2260 = vmatprep.subr.bf16.mxu0 %v2113
        %2261 = vmatpush1.bf16.msra.mxu0 %v2112
        %2262 = vmatprep.subr.bf16.mxu0 %v2120
        %2263 = vmatpush1.bf16.msra.mxu0 %v2119
        %2264 = vmatprep.subr.bf16.mxu0 %v2127
        %2265 = vmatpush1.bf16.msra.mxu0 %v2126
        %2266 = vmatprep.subr.bf16.mxu0 %v2134
        %2267 = vmatpush1.bf16.msra.mxu0 %v2133
        %2268 = vmatprep.subr.bf16.mxu0 %v2141
        %2269 = vmatpush1.bf16.msra.mxu0 %v2140
        %2270 = vmatprep.subr.bf16.mxu0 %v2148
        %2271 = vmatpush1.bf16.msra.mxu0 %v2147
        %2272 = vmatprep.subr.bf16.mxu0 %v2155
        %2273 = vmatpush1.bf16.msra.mxu0 %v2154
        %2274 = vmatprep.subr.bf16.mxu0 0
        %2275 = vmatpush1.bf16.msra.mxu0 0
        %2276 = vmatprep.subr.bf16.mxu0 0
        %2277 = vmatpush1.bf16.msra.mxu0 0
        %2278 = vmatprep.subr.bf16.mxu0 0
        %2279 = vmatpush1.bf16.msra.mxu0 0
        %2280 = vmatprep.subr.bf16.mxu0 0
        %2281 = vmatpush1.bf16.msra.mxu0 0
        %2282 = vmatprep.subr.bf16.mxu0 0
        %2283 = vmatpush1.bf16.msra.mxu0 0
        %2284 = vmatprep.subr.bf16.mxu0 0
        %2285 = vmatpush1.bf16.msra.mxu0 0
        %2286 = vmatprep.subr.bf16.mxu0 0
        %2287 = vmatpush1.bf16.msra.mxu0 0
        %2288 = vmatprep.subr.bf16.mxu0 0
        %2289 = vmatpush1.bf16.msra.mxu0 0
        %2290 = vmatprep.mubr.bf16.mxu0 0
        %2291 = vmatmul.mubr.bf16.gmra.mrb[0].mxu0 %v1862
        %v2292 = vpop.f32.mrb[0].mxu0
        %v2293 = vadd.f32 0.0, %v2292
        %v2294 = vpop.f32.mrb[0].mxu0
        %v2295 = vadd.f32 0.0, %v2294
        %v2296 = vpop.f32.mrb[0].mxu0
        %v2297 = vadd.f32 0.0, %v2296
        %v2298 = vpop.f32.mrb[0].mxu0
        %v2299 = vadd.f32 0.0, %v2298
        %2300 = vdwg.mxu0
        %2301 = vmatprep.subr.bf16.mxu0 %v2108
        %2302 = vmatpush1.bf16.msra.mxu0 %v2107
        %2303 = vmatprep.subr.bf16.mxu0 %v2115
        %2304 = vmatpush1.bf16.msra.mxu0 %v2114
        %2305 = vmatprep.subr.bf16.mxu0 %v2122
        %2306 = vmatpush1.bf16.msra.mxu0 %v2121
        %2307 = vmatprep.subr.bf16.mxu0 %v2129
        %2308 = vmatpush1.bf16.msra.mxu0 %v2128
        %2309 = vmatprep.subr.bf16.mxu0 %v2136
        %2310 = vmatpush1.bf16.msra.mxu0 %v2135
        %2311 = vmatprep.subr.bf16.mxu0 %v2143
        %2312 = vmatpush1.bf16.msra.mxu0 %v2142
        %2313 = vmatprep.subr.bf16.mxu0 %v2150
        %2314 = vmatpush1.bf16.msra.mxu0 %v2149
        %2315 = vmatprep.subr.bf16.mxu0 %v2157
        %2316 = vmatpush1.bf16.msra.mxu0 %v2156
        %2317 = vmatprep.subr.bf16.mxu0 0
        %2318 = vmatpush1.bf16.msra.mxu0 0
        %2319 = vmatprep.subr.bf16.mxu0 0
        %2320 = vmatpush1.bf16.msra.mxu0 0
        %2321 = vmatprep.subr.bf16.mxu0 0
        %2322 = vmatpush1.bf16.msra.mxu0 0
        %2323 = vmatprep.subr.bf16.mxu0 0
        %2324 = vmatpush1.bf16.msra.mxu0 0
        %2325 = vmatprep.subr.bf16.mxu0 0
        %2326 = vmatpush1.bf16.msra.mxu0 0
        %2327 = vmatprep.subr.bf16.mxu0 0
        %2328 = vmatpush1.bf16.msra.mxu0 0
        %2329 = vmatprep.subr.bf16.mxu0 0
        %2330 = vmatpush1.bf16.msra.mxu0 0
        %2331 = vmatprep.subr.bf16.mxu0 0
        %2332 = vmatpush1.bf16.msra.mxu0 0
        %2333 = vmatprep.mubr.bf16.mxu0 0
        %2334 = vmatmul.mubr.bf16.gmra.mrb[0].mxu0 %v1862
        %v2335 = vpop.f32.mrb[0].mxu0
        %v2336 = vadd.f32 0.0, %v2335
        %v2337 = vpop.f32.mrb[0].mxu0
        %v2338 = vadd.f32 0.0, %v2337
        %v2339 = vpop.f32.mrb[0].mxu0
        %v2340 = vadd.f32 0.0, %v2339
        %v2341 = vpop.f32.mrb[0].mxu0
        %v2342 = vadd.f32 0.0, %v2341
        %2343 = vdwg.mxu0
        %2344 = vmatprep.subr.bf16.mxu0 0
        %2345 = vmatpush1.bf16.msra.mxu0 %v2109
        %2346 = vmatprep.subr.bf16.mxu0 0
        %2347 = vmatpush1.bf16.msra.mxu0 %v2116
        %2348 = vmatprep.subr.bf16.mxu0 0
        %2349 = vmatpush1.bf16.msra.mxu0 %v2123
        %2350 = vmatprep.subr.bf16.mxu0 0
        %2351 = vmatpush1.bf16.msra.mxu0 %v2130
        %2352 = vmatprep.subr.bf16.mxu0 0
        %2353 = vmatpush1.bf16.msra.mxu0 %v2137
        %2354 = vmatprep.subr.bf16.mxu0 0
        %2355 = vmatpush1.bf16.msra.mxu0 %v2144
        %2356 = vmatprep.subr.bf16.mxu0 0
        %2357 = vmatpush1.bf16.msra.mxu0 %v2151
        %2358 = vmatprep.subr.bf16.mxu0 0
        %2359 = vmatpush1.bf16.msra.mxu0 %v2158
        %2360 = vmatprep.subr.bf16.mxu0 0
        %2361 = vmatpush1.bf16.msra.mxu0 0
        %2362 = vmatprep.subr.bf16.mxu0 0
        %2363 = vmatpush1.bf16.msra.mxu0 0
        %2364 = vmatprep.subr.bf16.mxu0 0
        %2365 = vmatpush1.bf16.msra.mxu0 0
        %2366 = vmatprep.subr.bf16.mxu0 0
        %2367 = vmatpush1.bf16.msra.mxu0 0
        %2368 = vmatprep.subr.bf16.mxu0 0
        %2369 = vmatpush1.bf16.msra.mxu0 0
        %2370 = vmatprep.subr.bf16.mxu0 0
        %2371 = vmatpush1.bf16.msra.mxu0 0
        %2372 = vmatprep.subr.bf16.mxu0 0
        %2373 = vmatpush1.bf16.msra.mxu0 0
        %2374 = vmatprep.subr.bf16.mxu0 0
        %2375 = vmatpush1.bf16.msra.mxu0 0
        %2376 = vmatprep.mubr.bf16.mxu0 0
        %2377 = vmatmul.mubr.bf16.gmra.mrb[0].mxu0 %v1862
        %v2378 = vpop.f32.mrb[0].mxu0
        %v2379 = vadd.f32 0.0, %v2378
        %v2380 = vpop.f32.mrb[0].mxu0
        %v2381 = vpop.f32.mrb[0].mxu0
        %v2382 = vadd.f32 0.0, %v2381
        %v2383 = vpop.f32.mrb[0].mxu0
        %2384 = vdwg.mxu0
        %v2385 = vpack.c.bf16 %v2254, %v2250
        %v2386 = vpack.c.bf16 %v2256, %v2252
        %v2387 = vpack.c.bf16 %v2297, %v2293
        %v2388 = vpack.c.bf16 %v2299, %v2295
        %v2389 = vpack.c.bf16 %v2340, %v2336
        %v2390 = vpack.c.bf16 %v2342, %v2338
        %v2391 = vpack.c.bf16 %v2382, %v2379
        %v2392 = vld [vmem:[#allocation28] sm:$0x7f]
        %v2394 = vcombine.high %v2392, %v2392
        %v2396 = vunpack.c.l.s4 1966171168
        %v2397 = vunpack.c.0.s8 %v2396
        %v2398 = vlaneseq
        %v2399 = vshrl.u32 %v2398, 7
        %v2400 = vsub.s32 %v2397, %v2399
        %v2401 = vrot.slane %v2392, %v2400
        %v2403 = vunpack.c.l.s4 1966171168
        %v2404 = vunpack.c.0.s8 %v2403
        %v2405 = vlaneseq
        %v2406 = vshrl.u32 %v2405, 7
        %v2407 = vsub.s32 %v2404, %v2406
        %v2408 = vrot.slane %v2394, %v2407
        %v2409 = vcombine.high %v2401, %v2401
        %v2410 = vcombine.high %v2408, %v2408
        %v2412 = vunpack.c.l.s4 1966171168
        %v2413 = vunpack.c.0.s8 %v2412
        %v2414 = vlaneseq
        %v2415 = vshrl.u32 %v2414, 7
        %v2416 = vsub.s32 %v2413, %v2415
        %v2417 = vrot.slane %v2401, %v2416
        %v2419 = vunpack.c.l.s4 1966171168
        %v2420 = vunpack.c.0.s8 %v2419
        %v2421 = vlaneseq
        %v2422 = vshrl.u32 %v2421, 7
        %v2423 = vsub.s32 %v2420, %v2422
        %v2424 = vrot.slane %v2408, %v2423
        %v2426 = vunpack.c.l.s4 1966171168
        %v2427 = vunpack.c.0.s8 %v2426
        %v2428 = vlaneseq
        %v2429 = vshrl.u32 %v2428, 7
        %v2430 = vsub.s32 %v2427, %v2429
        %v2431 = vrot.slane %v2409, %v2430
        %v2433 = vunpack.c.l.s4 1966171168
        %v2434 = vunpack.c.0.s8 %v2433
        %v2435 = vlaneseq
        %v2436 = vshrl.u32 %v2435, 7
        %v2437 = vsub.s32 %v2434, %v2436
        %v2438 = vrot.slane %v2410, %v2437
        %v2439 = vcombine.high %v2417, %v2417
        %v2440 = vcombine.high %v2424, %v2424
        %v2441 = vcombine.high %v2431, %v2431
        %v2443 = vpack.i.b16 %v2417, %v2417
        %v2445 = vlaneseq
        %v2446 = vshrl.u32 %v2445, 7
        %v2447 = vsub.s32 0, %v2446
        %v2448 = vrot.slane %v2443, %v2447
        %v2450 = vpack.i.b16 %v2431, %v2431
        %v2452 = vlaneseq
        %v2453 = vshrl.u32 %v2452, 7
        %v2454 = vsub.s32 0, %v2453
        %v2455 = vrot.slane %v2450, %v2454
        %v2457 = vpack.i.b16 %v2439, %v2439
        %v2459 = vlaneseq
        %v2460 = vshrl.u32 %v2459, 7
        %v2461 = vsub.s32 0, %v2460
        %v2462 = vrot.slane %v2457, %v2461
        %v2464 = vpack.i.b16 %v2441, %v2441
        %v2466 = vlaneseq
        %v2467 = vshrl.u32 %v2466, 7
        %v2468 = vsub.s32 0, %v2467
        %v2469 = vrot.slane %v2464, %v2468
        %v2471 = vpack.i.b16 %v2424, %v2424
        %v2473 = vlaneseq
        %v2474 = vshrl.u32 %v2473, 7
        %v2475 = vsub.s32 0, %v2474
        %v2476 = vrot.slane %v2471, %v2475
        %v2478 = vpack.i.b16 %v2438, %v2438
        %v2480 = vlaneseq
        %v2481 = vshrl.u32 %v2480, 7
        %v2482 = vsub.s32 0, %v2481
        %v2483 = vrot.slane %v2478, %v2482
        %v2485 = vpack.i.b16 %v2440, %v2440
        %v2487 = vlaneseq
        %v2488 = vshrl.u32 %v2487, 7
        %v2489 = vsub.s32 0, %v2488
        %v2490 = vrot.slane %v2485, %v2489
        %v2491 = vadd.bf16 %v2385, %v2448
        %v2492 = vadd.bf16 %v2386, %v2455
        %v2493 = vadd.bf16 %v2387, %v2462
        %v2494 = vadd.bf16 %v2388, %v2469
        %v2495 = vadd.bf16 %v2389, %v2476
        %v2496 = vadd.bf16 %v2390, %v2483
        %v2497 = vadd.bf16 %v2391, %v2490
        %v2498 = vunpack.c.l.bf16 %v2491
        %v2499 = vunpack.c.l.bf16 %v2492
        %v2500 = vunpack.c.l.bf16 %v2493
        %v2501 = vunpack.c.l.bf16 %v2494
        %v2502 = vunpack.c.l.bf16 %v2495
        %v2503 = vunpack.c.l.bf16 %v2496
        %v2504 = vunpack.c.l.bf16 %v2497
        %v2505 = vunpack.c.h.bf16 %v2491
        %v2506 = vunpack.c.h.bf16 %v2492
        %v2507 = vunpack.c.h.bf16 %v2493
        %v2508 = vunpack.c.h.bf16 %v2494
        %v2509 = vunpack.c.h.bf16 %v2495
        %v2510 = vunpack.c.h.bf16 %v2496
        %v2511 = vunpack.c.h.bf16 %v2497
        %v2512 = vsub.f32 0.0, %v2498
        %v2513 = vsub.f32 0.0, %v2499
        %v2514 = vsub.f32 0.0, %v2500
        %v2515 = vsub.f32 0.0, %v2501
        %v2516 = vsub.f32 0.0, %v2502
        %v2517 = vsub.f32 0.0, %v2503
        %v2518 = vsub.f32 0.0, %v2504
        %v2519 = vsub.f32 0.0, %v2505
        %v2520 = vsub.f32 0.0, %v2506
        %v2521 = vsub.f32 0.0, %v2507
        %v2522 = vsub.f32 0.0, %v2508
        %v2523 = vsub.f32 0.0, %v2509
        %v2524 = vsub.f32 0.0, %v2510
        %v2525 = vsub.f32 0.0, %v2511
        %v2526 = vmul.f32 %v2512, 1.442695
        %v2527 = vpow.pop %v2526
        %v2528 = vmul.f32 %v2513, 1.442695
        %v2529 = vpow.pop %v2528
        %v2530 = vmul.f32 %v2514, 1.442695
        %v2531 = vpow.pop %v2530
        %v2532 = vmul.f32 %v2515, 1.442695
        %v2533 = vpow.pop %v2532
        %v2534 = vmul.f32 %v2516, 1.442695
        %v2535 = vpow.pop %v2534
        %v2536 = vmul.f32 %v2517, 1.442695
        %v2537 = vpow.pop %v2536
        %v2538 = vmul.f32 %v2518, 1.442695
        %v2539 = vpow.pop %v2538
        %v2540 = vmul.f32 %v2519, 1.442695
        %v2541 = vpow.pop %v2540
        %v2542 = vmul.f32 %v2520, 1.442695
        %v2543 = vpow.pop %v2542
        %v2544 = vmul.f32 %v2521, 1.442695
        %v2545 = vpow.pop %v2544
        %v2546 = vmul.f32 %v2522, 1.442695
        %v2547 = vpow.pop %v2546
        %v2548 = vmul.f32 %v2523, 1.442695
        %v2549 = vpow.pop %v2548
        %v2550 = vmul.f32 %v2524, 1.442695
        %v2551 = vpow.pop %v2550
        %v2552 = vmul.f32 %v2525, 1.442695
        %v2553 = vpow.pop %v2552
        %v2554 = vadd.f32 %v2527, 1.0
        %v2555 = vadd.f32 %v2529, 1.0
        %v2556 = vadd.f32 %v2531, 1.0
        %v2557 = vadd.f32 %v2533, 1.0
        %v2558 = vadd.f32 %v2535, 1.0
        %v2559 = vadd.f32 %v2537, 1.0
        %v2560 = vadd.f32 %v2539, 1.0
        %v2561 = vadd.f32 %v2541, 1.0
        %v2562 = vadd.f32 %v2543, 1.0
        %v2563 = vadd.f32 %v2545, 1.0
        %v2564 = vadd.f32 %v2547, 1.0
        %v2565 = vadd.f32 %v2549, 1.0
        %v2566 = vadd.f32 %v2551, 1.0
        %v2567 = vadd.f32 %v2553, 1.0
        %v2568 = vrcp.pop %v2554
        %v2569 = vrcp.pop %v2555
        %v2570 = vrcp.pop %v2556
        %v2571 = vrcp.pop %v2557
        %v2572 = vrcp.pop %v2558
        %v2573 = vrcp.pop %v2559
        %v2574 = vrcp.pop %v2560
        %v2575 = vrcp.pop %v2561
        %v2576 = vrcp.pop %v2562
        %v2577 = vrcp.pop %v2563
        %v2578 = vrcp.pop %v2564
        %v2579 = vrcp.pop %v2565
        %v2580 = vrcp.pop %v2566
        %v2581 = vrcp.pop %v2567
        %v2582 = vpack.c.bf16 %v2575, %v2568
        %v2583 = vpack.c.bf16 %v2576, %v2569
        %v2584 = vpack.c.bf16 %v2577, %v2570
        %v2585 = vpack.c.bf16 %v2578, %v2571
        %v2586 = vpack.c.bf16 %v2579, %v2572
        %v2587 = vpack.c.bf16 %v2580, %v2573
        %v2588 = vpack.c.bf16 %v2581, %v2574
        %v2596 = vunpack.c.l.b16 %v2582
        %v2597 = vunpack.c.l.b16 %v2583
        %v2598 = vunpack.c.l.b16 %v2584
        %v2599 = vunpack.c.l.b16 %v2585
        %v2600 = vunpack.c.l.b16 %v2586
        %v2601 = vunpack.c.l.b16 %v2587
        %v2602 = vunpack.c.l.b16 %v2588
        %v2603 = vunpack.c.h.b16 %v2582
        %v2604 = vunpack.c.h.b16 %v2583
        %v2605 = vunpack.c.h.b16 %v2584
        %v2606 = vunpack.c.h.b16 %v2585
        %v2607 = vunpack.c.h.b16 %v2586
        %v2608 = vunpack.c.h.b16 %v2587
        %v2609 = vunpack.c.h.b16 %v2588
        %v2610 = vpack.c.b16 %v2597, %v2596
        %v2611 = vpack.c.b16 %v2599, %v2598
        %v2612 = vpack.c.b16 %v2601, %v2600
        %v2613 = vpack.c.b16 %v2602, %v2602
        %v2614 = vpack.c.b16 %v2604, %v2603
        %v2615 = vpack.c.b16 %v2606, %v2605
        %v2616 = vpack.c.b16 %v2608, %v2607
        %v2617 = vpack.c.b16 %v2609, %v2609
        %2626 = vst [vmem:[%s781] sm:$0xff] %v2610
        %2627 = vst [vmem:[%s781 + $0x8] sm:$0xff] %v2611
        %2628 = vst [vmem:[%s781 + $0x10] sm:$0xff] %v2612
        %vm2629 = vcmask 125952
        %2630 = vst.msk [vmem:[%s781 + $0x18] sm:$0xf] %vm2629, %v2613
        %2631 = vst [vmem:[%s781 + $0x1c] sm:$0xff] %v2614
        %2632 = vst [vmem:[%s781 + $0x24] sm:$0xff] %v2615
        %2633 = vst [vmem:[%s781 + $0x2c] sm:$0xff] %v2616
        %2634 = vst.msk [vmem:[%s781 + $0x34] sm:$0xf] %vm2629, %v2617
        %s2635 = sand.u32 %s412, 1
        %s2636 = scalar_lea.sflag [#allocation4], %s2635
        %s2637 = sand.u32 %s412, 1
        %s2638 = smul.addr %s2637, 56
        %s2639 = scalar_lea.vmem [#allocation29], %s2638
        // Predicated region
        $region157: #{tpu_custom_call.1} parent=87 // pred_check
          %p2640 = pneg %p422
        $region158: #{tpu_custom_call.1} parent=87 // pred_check_branch
          %2642 = sbr.rel (%p2640) target = $region160
        $region159: #{tpu_custom_call.1} parent=87 // pred_region
          %s2643 = smul.u32 2, %s42
          %s2645 = ssub.s32 896, 896
          %2646 = vsyncadd %s2636, %s2645
          %s2647 = smul.addr %s2643, 7
          %s2648 = smul.addr %s2647, 64
          %s2649 = scalar_lea.hbm %s17, %s2648
          %s2650 = sshll.u32 %s2639, 4
          %s2651 = int_to_ptr.vmem [resolvable:$true] %s2650
          %2656 = dma.vmem_to_hbm [thread:$0]  %s2651, 896, %s2649, %s2636, 448, 448, 28
        $region160: #{tpu_custom_call.1} parent=87 // pred_fallthru
          _
      $region88: #{tpu_custom_call.1} parent=5 // pred_fallthru
        _
      %p2657 = scmp.le.s32.totalorder 2, %s37
      // Predicated region
      $region161: #{tpu_custom_call.1} parent=5 // pred_check
        %p2658 = pneg %p2657
      $region162: #{tpu_custom_call.1} parent=5 // pred_check_branch
        %2660 = sbr.rel (%p2658) target = $region164
      $region163: #{tpu_custom_call.1} parent=5 // pred_region
        %s2661 = ssub.s32 %s37, 2
        // Predicated region
        $region165: #{tpu_custom_call.1} parent=163 // pred_check
          %p2662 = pneg %p428
        $region166: #{tpu_custom_call.1} parent=163 // pred_check_branch
          %2664 = sbr.rel (%p2662) target = $region168
        $region167: #{tpu_custom_call.1} parent=163 // pred_region
          %s2665 = sand.u32 %s413, 1
          %s2666 = scalar_lea.sflag [#allocation4], %s2665
          %s2667 = sand.u32 %s413, 1
          %s2668 = smul.addr %s2667, 56
          %s2669 = scalar_lea.vmem [#allocation29], %s2668
          %2670 = dma.done %s2666, 896
        $region168: #{tpu_custom_call.1} parent=163 // pred_fallthru
          _
      $region164: #{tpu_custom_call.1} parent=5 // pred_fallthru
        _
    $region6: #{tpu_custom_call.1} parent=1 // loop_footer
      %s41 = sadd.s32 1, %s37
    $region7: #{tpu_custom_call.1} parent=1 // loop_footer_branch
      %36 = sbr.rel target = $region3
    $region8: #{tpu_custom_call.1} parent=1 // loop_exit
      _
    %2671 = vsyncpa [#allocation3], 1
    %s2672 = scalar_lea.sflag [#allocation3], 1
    %2673 = vsyncpa %s2672, 1
    %2674 = vsyncpa [#allocation6], 1
    %2675 = vsyncpa [#allocation9], 1
    %2676 = vsyncpa [#allocation12], 1
    %2677 = vsyncpa [#allocation15], 1
    %2678 = vsyncpa [#allocation18], 1
    %2679 = vsyncpa [#allocation21], 1
    %2680 = vsyncpa [#allocation24], 1
    %2681 = vsyncpa [#allocation27], 1
    %2682 = vsyncpa [#allocation4], 1
    %s2683 = scalar_lea.sflag [#allocation4], 1
    %2684 = vsyncpa %s2683, 1

</llo_original>
